<compile_context>
chip_gen: v5e
topology: v5e:2x2
jax: 0.10.0
libtpu: 0.0.40
codegen_flags: <defaults>
</compile_context>

<pallas_src>
import math
import functools

import jax
import jax.numpy as jnp
from jax.experimental import pallas as pl
from jax.experimental.pallas import tpu as pltpu


def _encoder_kernel(n_heads,
                    mask_ref, x_ref,
                    wqkv_ref, bqkv_ref, wo_ref, bo_ref,
                    w1_ref, b1_ref, w2_ref, b2_ref, w3_ref, b3_ref,
                    gamma_ref, beta_ref,
                    out_ref):
    """One grid step = one batch element's (S, E) token slab.

    Attention is independent per batch element; FFN / LayerNorm are per-token,
    so the batch grid axis is fully parallel (v7x megacore shards it).
    """
    f32 = jnp.float32
    x = x_ref[...]                               # (S, E) f32
    S, E = x.shape
    hd = E // n_heads
    scale = f32(1.0 / math.sqrt(hd))
    cdt = wqkv_ref.dtype                         # matmul-operand dtype (bf16 or f32)

    # ---- QKV in-projection with head-major weights (3*nH, E, hd).
    # Batched matmul keeps q/k/v and heads separated along the LEADING axis,
    # so no lane-axis slicing / jnp.stack is needed afterwards.
    xb = jnp.broadcast_to(x.astype(cdt)[None], (3 * n_heads, S, E))
    qkv = jnp.einsum('gse,ged->gsd', xb, wqkv_ref[...],
                     preferred_element_type=f32) + bqkv_ref[...]       # (3nH, S, hd) f32

    q = qkv[0 * n_heads:1 * n_heads].astype(cdt)                       # (nH, S, hd)
    k = qkv[1 * n_heads:2 * n_heads].astype(cdt)
    v = qkv[2 * n_heads:3 * n_heads].astype(cdt)

    # ---- scaled dot-product attention, batched over heads ----
    # Key-padding mask broadcast in-kernel as an additive -1e30 bias.
    # TODO(synk): a fully-masked key row yields a uniform distribution here rather than
    # PyTorch's NaN behavior for all-masked rows (benign for this use).
    neg = jnp.where(mask_ref[0] == 0.0, f32(-1e30), f32(0.0))          # (1, S)
    s = jnp.einsum('hqd,hkd->hqk', q, k, preferred_element_type=f32)   # (nH, S, S)
    s = s * scale + neg[None, :, :]
    m = jnp.max(s, axis=-1, keepdims=True)
    e = jnp.exp(s - m)
    inv = pl.reciprocal(jnp.sum(e, axis=-1, keepdims=True), approx=True)   # EUP slot
    p = (e * inv).astype(cdt)
    o = jnp.einsum('hqk,hkd->hqd', p, v, preferred_element_type=f32)   # (nH, S, hd) f32

    # ---- output projection: one small lane-concat rebuilds (S, E), then a single
    # full-depth (E = nH*hd) matmul against the untiled (E, E) weight. ----
    o_cat = jnp.concatenate([o[h] for h in range(n_heads)], axis=-1)   # (S, E)
    attn = jnp.dot(o_cat.astype(cdt), wo_ref[...],
                   preferred_element_type=f32) + bo_ref[...]           # (S, E)

    gamma = gamma_ref[...]                       # (1, E)
    beta = beta_ref[...]                         # (1, E)

    def layer_norm(z):                           # two-pass variance (matches reference)
        mu = jnp.mean(z, axis=-1, keepdims=True)
        c = z - mu
        var = jnp.mean(c * c, axis=-1, keepdims=True)
        return c * jax.lax.rsqrt(var + 1e-5) * gamma + beta

    # dropout(attn) + x  (dropout = identity in eval)
    y = layer_norm(attn + x)

    # ---- feed-forward: Linear -> ReLU -> Linear -> ReLU -> Linear ----
    h1 = jnp.maximum(jnp.dot(y.astype(cdt), w1_ref[...],
                             preferred_element_type=f32) + b1_ref[...], 0.0)
    h2 = jnp.maximum(jnp.dot(h1.astype(cdt), w2_ref[...],
                             preferred_element_type=f32) + b2_ref[...], 0.0)
    ff = jnp.dot(h2.astype(cdt), w3_ref[...],
                 preferred_element_type=f32) + b3_ref[...]

    out_ref[...] = layer_norm(ff + y).astype(out_ref.dtype)


def encoder_forward(x, mask, params, n_heads, matmul_dtype=jnp.bfloat16):
    """x: (B, S, E) float32, mask: (B, S) float32 (0 => padded key position)."""
    B, S, E = x.shape
    H = params["b1"].shape[-1]
    hd = E // n_heads
    cdt = matmul_dtype

    # Head-major QKV weight: (3*nH, E, hd); g = section*nH + head, section 0/1/2 = q/k/v.
    wqkv_heads = (params["in_proj_weight"]
                  .reshape(3, n_heads, hd, E)
                  .transpose(0, 1, 3, 2)
                  .reshape(3 * n_heads, E, hd)
                  .astype(cdt))
    bqkv_heads = params["in_proj_bias"].reshape(3 * n_heads, 1, hd).astype(jnp.float32)

    wo_t = params["out_proj_weight"].T.astype(cdt)             # (E, E), untiled
    w1_t = params["w1"].T.astype(cdt)                          # (E, H)
    w2_t = params["w2"].T.astype(cdt)                          # (H, H)
    w3_t = params["w3"].T.astype(cdt)                          # (H, E)

    # Biases / LN params stay float32 (elementwise math stays f32 on all chips).
    bo = params["out_proj_bias"].reshape(1, E).astype(jnp.float32)
    b1 = params["b1"].reshape(1, H).astype(jnp.float32)
    b2 = params["b2"].reshape(1, H).astype(jnp.float32)
    b3 = params["b3"].reshape(1, E).astype(jnp.float32)
    gamma = params["ln_weight"].reshape(1, E).astype(jnp.float32)
    beta = params["ln_bias"].reshape(1, E).astype(jnp.float32)

    mask3 = mask.reshape(B, 1, S).astype(jnp.float32)          # raw mask; bias built in-kernel
    x2d = x.reshape(B * S, E).astype(jnp.float32)

    def resident(a):                        # full-array block, constant index_map
        nd = a.ndim
        return pl.BlockSpec(a.shape, lambda b, nd=nd: (0,) * nd)

    weights = (wqkv_heads, bqkv_heads, wo_t, bo,
               w1_t, b1, w2_t, b2, w3_t, b3, gamma, beta)

    kernel = functools.partial(_encoder_kernel, n_heads)

    out2d = pl.pallas_call(
        kernel,
        out_shape=jax.ShapeDtypeStruct((B * S, E), jnp.float32),
        grid_spec=pltpu.PrefetchScalarGridSpec(
            num_scalar_prefetch=0,
            grid=(B,),                                          # parallel over batch
            in_specs=[pl.BlockSpec((1, 1, S), lambda b: (b, 0, 0)),   # mask row b
                      pl.BlockSpec((S, E), lambda b: (b, 0))]         # tokens of batch b
                     + [resident(a) for a in weights],
            out_specs=pl.BlockSpec((S, E), lambda b: (b, 0)),
        ),
        compiler_params=pltpu.CompilerParams(
            dimension_semantics=("parallel",)),                 # v7x: shard over 2 TCs
    )(mask3, x2d, *weights)
    return out2d.reshape(B, S, E)


def encoder_reference(x, mask, params, n_heads):
    """Pure-JAX reference mirroring PyTorch eval-mode semantics (float32 throughout)."""
    B, S, E = x.shape
    hd = E // n_heads
    scale = 1.0 / math.sqrt(hd)
    kpm = mask == 0.0                                           # (B, S)

    qkv = jnp.einsum("bse,fe->bsf", x, params["in_proj_weight"]) + params["in_proj_bias"]
    q, k, v = jnp.split(qkv, 3, axis=-1)

    def heads(t):  # (B, S, E) -> (B, nH, S, hd)
        return t.reshape(B, S, n_heads, hd).transpose(0, 2, 1, 3)

    qh, kh, vh = heads(q), heads(k), heads(v)
    s = jnp.einsum("bhqd,bhkd->bhqk", qh, kh) * scale
    s = jnp.where(kpm[:, None, None, :], -1e30, s)
    p = jax.nn.softmax(s, axis=-1)
    a = jnp.einsum("bhqk,bhkd->bhqd", p, vh).transpose(0, 2, 1, 3).reshape(B, S, E)
    attn = jnp.einsum("bse,fe->bsf", a, params["out_proj_weight"]) + params["out_proj_bias"]

    def layer_norm(z):
        mu = jnp.mean(z, axis=-1, keepdims=True)
        var = jnp.mean((z - mu) ** 2, axis=-1, keepdims=True)
        return (z - mu) * jax.lax.rsqrt(var + 1e-5) * params["ln_weight"] + params["ln_bias"]

    y = layer_norm(attn + x)
    h1 = jax.nn.relu(jnp.einsum("bse,he->bsh", y, params["w1"]) + params["b1"])
    h2 = jax.nn.relu(jnp.einsum("bsh,gh->bsg", h1, params["w2"]) + params["b2"])
    ff = jnp.einsum("bsh,eh->bse", h2, params["w3"]) + params["b3"]
    return layer_norm(ff + y)


def init_params(key, embedding_dim, hidden_size):
    E, H = embedding_dim, hidden_size
    ks = jax.random.split(key, 12)
    s = 0.05
    return {
        "in_proj_weight": s * jax.random.normal(ks[0], (3 * E, E), jnp.float32),
        "in_proj_bias": s * jax.random.normal(ks[1], (3 * E,), jnp.float32),
        "out_proj_weight": s * jax.random.normal(ks[2], (E, E), jnp.float32),
        "out_proj_bias": s * jax.random.normal(ks[3], (E,), jnp.float32),
        "w1": s * jax.random.normal(ks[4], (H, E), jnp.float32),
        "b1": s * jax.random.normal(ks[5], (H,), jnp.float32),
        "w2": s * jax.random.normal(ks[6], (H, H), jnp.float32),
        "b2": s * jax.random.normal(ks[7], (H,), jnp.float32),
        "w3": s * jax.random.normal(ks[8], (E, H), jnp.float32),
        "b3": s * jax.random.normal(ks[9], (E,), jnp.float32),
        "ln_weight": jnp.ones((E,), jnp.float32),
        "ln_bias": jnp.zeros((E,), jnp.float32),
    }


if __name__ == "__main__":
    # Lane-aligned small config: E and H are multiples of 128 (lane-dense stores,
    # full-depth MXU contractions); embedding_dim divisible by n_heads.
    B, S = 2, 8
    EMBED, N_HEADS, HIDDEN = 128, 4, 128

    key = jax.random.PRNGKey(0)
    k_x, k_p = jax.random.split(key)
    x = jax.random.normal(k_x, (B, S, EMBED), jnp.float32)
    # mask: 1 = valid token, 0 = padding (last two positions of batch 1 padded)
    mask = jnp.ones((B, S), jnp.float32).at[1, -2:].set(0.0)

    params = init_params(k_p, EMBED, HIDDEN)
    ref = encoder_reference(x, mask, params, N_HEADS)

    # 1) float32-operand path: tight correctness check (small slack for the EUP
    #    approximate-reciprocal softmax normalization).
    out_f32 = jax.block_until_ready(
        encoder_forward(x, mask, params, N_HEADS, matmul_dtype=jnp.float32))
    assert out_f32.shape == (B, S, EMBED)
    err_f32 = float(jnp.max(jnp.abs(out_f32 - ref)))
    assert jnp.allclose(out_f32, ref, rtol=5e-3, atol=5e-3), f"f32 mismatch, max err {err_f32}"

    # 2) default bf16-operand path (MXU-native matmuls, f32 accumulation).
    out_bf16 = jax.block_until_ready(encoder_forward(x, mask, params, N_HEADS))
    assert out_bf16.shape == (B, S, EMBED)
    err_bf16 = float(jnp.max(jnp.abs(out_bf16 - ref)))
    assert jnp.allclose(out_bf16, ref, rtol=3e-2, atol=3e-2), f"bf16 mismatch, max err {err_bf16}"

    print("KERNEL_OK")
</pallas_src>

<mosaic_0001>
module attributes {stable_mosaic.version = 11 : i64} {
  func.func @_encoder_kernel(%arg0: i32, %arg1: memref<1x1x8xf32, #tpu.memory_space<vmem>>, %arg2: memref<8x128xf32, #tpu.memory_space<vmem>>, %arg3: memref<12x128x32xf32, #tpu.memory_space<vmem>>, %arg4: memref<12x1x32xf32, #tpu.memory_space<vmem>>, %arg5: memref<128x128xf32, #tpu.memory_space<vmem>>, %arg6: memref<1x128xf32, #tpu.memory_space<vmem>>, %arg7: memref<128x128xf32, #tpu.memory_space<vmem>>, %arg8: memref<1x128xf32, #tpu.memory_space<vmem>>, %arg9: memref<128x128xf32, #tpu.memory_space<vmem>>, %arg10: memref<1x128xf32, #tpu.memory_space<vmem>>, %arg11: memref<128x128xf32, #tpu.memory_space<vmem>>, %arg12: memref<1x128xf32, #tpu.memory_space<vmem>>, %arg13: memref<1x128xf32, #tpu.memory_space<vmem>>, %arg14: memref<1x128xf32, #tpu.memory_space<vmem>>, %arg15: memref<8x128xf32, #tpu.memory_space<vmem>>) attributes {dimension_semantics = [#tpu.dimension_semantics<parallel>], iteration_bounds = array<i64: 2>, scalar_prefetch = 0 : i64, scratch_operands = 0 : i64, tpu.core_type = #tpu.core_type<tc>, window_params = [{transform_indices = @transform_0, window_bounds = array<i64: 1, 1, 8>}, {transform_indices = @transform_1, window_bounds = array<i64: 8, 128>}, {pipeline_mode = #tpu.pipeline_mode<synchronous>, transform_indices = @transform_2, window_bounds = array<i64: 12, 128, 32>}, {pipeline_mode = #tpu.pipeline_mode<synchronous>, transform_indices = @transform_3, window_bounds = array<i64: 12, 1, 32>}, {pipeline_mode = #tpu.pipeline_mode<synchronous>, transform_indices = @transform_4, window_bounds = array<i64: 128, 128>}, {pipeline_mode = #tpu.pipeline_mode<synchronous>, transform_indices = @transform_5, window_bounds = array<i64: 1, 128>}, {pipeline_mode = #tpu.pipeline_mode<synchronous>, transform_indices = @transform_6, window_bounds = array<i64: 128, 128>}, {pipeline_mode = #tpu.pipeline_mode<synchronous>, transform_indices = @transform_7, window_bounds = array<i64: 1, 128>}, {pipeline_mode = #tpu.pipeline_mode<synchronous>, transform_indices = @transform_8, window_bounds = array<i64: 128, 128>}, {pipeline_mode = #tpu.pipeline_mode<synchronous>, transform_indices = @transform_9, window_bounds = array<i64: 1, 128>}, {pipeline_mode = #tpu.pipeline_mode<synchronous>, transform_indices = @transform_10, window_bounds = array<i64: 128, 128>}, {pipeline_mode = #tpu.pipeline_mode<synchronous>, transform_indices = @transform_11, window_bounds = array<i64: 1, 128>}, {pipeline_mode = #tpu.pipeline_mode<synchronous>, transform_indices = @transform_12, window_bounds = array<i64: 1, 128>}, {pipeline_mode = #tpu.pipeline_mode<synchronous>, transform_indices = @transform_13, window_bounds = array<i64: 1, 128>}, {transform_indices = @transform_14, window_bounds = array<i64: 8, 128>}]} {
    %c0 = arith.constant 0 : index
    %c0_0 = arith.constant 0 : index
    %0 = vector.load %arg2[%c0, %c0_0] : memref<8x128xf32, #tpu.memory_space<vmem>>, vector<8x128xf32>
    %1 = vector.shape_cast %0 : vector<8x128xf32> to vector<1x8x128xf32>
    %2 = vector.shape_cast %1 : vector<1x8x128xf32> to vector<1x8x128xf32>
    %3 = vector.broadcast %2 : vector<1x8x128xf32> to vector<12x8x128xf32>
    %c0_1 = arith.constant 0 : index
    %c0_2 = arith.constant 0 : index
    %c0_3 = arith.constant 0 : index
    %4 = vector.load %arg3[%c0_1, %c0_2, %c0_3] : memref<12x128x32xf32, #tpu.memory_space<vmem>>, vector<12x128x32xf32>
    "tpu.trace_start"() <{level = 10 : i32, message = "gse,ged->gsd"}> : () -> ()
    %cst = arith.constant dense<0.000000e+00> : vector<12x8x32xf32>
    %5 = tpu.matmul %3, %4, %cst {dimension_numbers = #tpu.dot_dimension_numbers<[2], [1], [1], [2], [0, 0, 0, 1, 1, 2], [0], [0]>} : vector<12x8x128xf32>, vector<12x128x32xf32>, vector<12x8x32xf32> -> vector<12x8x32xf32>
    "tpu.trace_stop"() : () -> ()
    %c0_4 = arith.constant 0 : index
    %c0_5 = arith.constant 0 : index
    %c0_6 = arith.constant 0 : index
    %6 = vector.load %arg4[%c0_4, %c0_5, %c0_6] : memref<12x1x32xf32, #tpu.memory_space<vmem>>, vector<12x1x32xf32>
    %7 = vector.broadcast %6 : vector<12x1x32xf32> to vector<12x8x32xf32>
    %8 = arith.addf %5, %7 : vector<12x8x32xf32>
    %9 = vector.extract_strided_slice %8 {offsets = [0, 0, 0], sizes = [4, 8, 32], strides = [1, 1, 1]} : vector<12x8x32xf32> to vector<4x8x32xf32>
    %10 = vector.extract_strided_slice %8 {offsets = [4, 0, 0], sizes = [4, 8, 32], strides = [1, 1, 1]} : vector<12x8x32xf32> to vector<4x8x32xf32>
    %11 = vector.extract_strided_slice %8 {offsets = [8, 0, 0], sizes = [4, 8, 32], strides = [1, 1, 1]} : vector<12x8x32xf32> to vector<4x8x32xf32>
    %c0_7 = arith.constant 0 : index
    %c0_8 = arith.constant 0 : index
    %c0_9 = arith.constant 0 : index
    %12 = vector.load %arg1[%c0_7, %c0_8, %c0_9] : memref<1x1x8xf32, #tpu.memory_space<vmem>>, vector<1x1x8xf32>
    %13 = vector.shape_cast %12 : vector<1x1x8xf32> to vector<1x8xf32>
    %cst_10 = arith.constant 0.000000e+00 : f32
    %14 = vector.broadcast %cst_10 : f32 to vector<1x8xf32>
    %15 = arith.cmpf oeq, %13, %14 : vector<1x8xf32>
    %cst_11 = arith.constant -1.000000e+30 : f32
    %cst_12 = arith.constant 0.000000e+00 : f32
    %16 = vector.broadcast %cst_11 : f32 to vector<1x8xf32>
    %17 = vector.broadcast %cst_12 : f32 to vector<1x8xf32>
    %18 = arith.select %15, %16, %17 : vector<1x8xi1>, vector<1x8xf32>
    "tpu.trace_start"() <{level = 10 : i32, message = "hqd,hkd->hqk"}> : () -> ()
    %cst_13 = arith.constant dense<0.000000e+00> : vector<4x8x8xf32>
    %19 = tpu.matmul %9, %10, %cst_13 {dimension_numbers = #tpu.dot_dimension_numbers<[2], [2], [1], [1], [0, 0, 0, 1, 1, 1], [0], [0]>} : vector<4x8x32xf32>, vector<4x8x32xf32>, vector<4x8x8xf32> -> vector<4x8x8xf32>
    "tpu.trace_stop"() : () -> ()
    %cst_14 = arith.constant 0.176776692 : f32
    %20 = vector.broadcast %cst_14 : f32 to vector<4x8x8xf32>
    %21 = arith.mulf %19, %20 : vector<4x8x8xf32>
    %22 = vector.shape_cast %18 : vector<1x8xf32> to vector<1x1x8xf32>
    %23 = vector.broadcast %22 : vector<1x1x8xf32> to vector<4x8x8xf32>
    %24 = arith.addf %21, %23 : vector<4x8x8xf32>
    %cst_15 = arith.constant dense<0xFF800000> : vector<4x8xf32>
    %25 = vector.multi_reduction <maximumf>, %24, %cst_15 [2] : vector<4x8x8xf32> to vector<4x8xf32>
    %26 = vector.shape_cast %25 : vector<4x8xf32> to vector<4x8x1xf32>
    %27 = vector.broadcast %26 : vector<4x8x1xf32> to vector<4x8x8xf32>
    %28 = arith.subf %24, %27 : vector<4x8x8xf32>
    %29 = math.exp %28 : vector<4x8x8xf32>
    %cst_16 = arith.constant dense<0.000000e+00> : vector<4x8xf32>
    %30 = vector.multi_reduction <add>, %29, %cst_16 [2] : vector<4x8x8xf32> to vector<4x8xf32>
    %31 = vector.shape_cast %30 : vector<4x8xf32> to vector<4x8x1xf32>
    %32 = tpu.reciprocal %31 {approx = true} : vector<4x8x1xf32> -> vector<4x8x1xf32>
    %33 = vector.broadcast %32 : vector<4x8x1xf32> to vector<4x8x8xf32>
    %34 = arith.mulf %29, %33 : vector<4x8x8xf32>
    "tpu.trace_start"() <{level = 10 : i32, message = "hqk,hkd->hqd"}> : () -> ()
    %cst_17 = arith.constant dense<0.000000e+00> : vector<4x8x32xf32>
    %35 = tpu.matmul %34, %11, %cst_17 {dimension_numbers = #tpu.dot_dimension_numbers<[2], [1], [1], [2], [0, 0, 0, 1, 1, 2], [0], [0]>} : vector<4x8x8xf32>, vector<4x8x32xf32>, vector<4x8x32xf32> -> vector<4x8x32xf32>
    "tpu.trace_stop"() : () -> ()
    %36 = vector.extract_strided_slice %35 {offsets = [0, 0, 0], sizes = [1, 8, 32], strides = [1, 1, 1]} : vector<4x8x32xf32> to vector<1x8x32xf32>
    %37 = vector.shape_cast %36 : vector<1x8x32xf32> to vector<8x32xf32>
    %38 = vector.extract_strided_slice %35 {offsets = [1, 0, 0], sizes = [1, 8, 32], strides = [1, 1, 1]} : vector<4x8x32xf32> to vector<1x8x32xf32>
    %39 = vector.shape_cast %38 : vector<1x8x32xf32> to vector<8x32xf32>
    %40 = vector.extract_strided_slice %35 {offsets = [2, 0, 0], sizes = [1, 8, 32], strides = [1, 1, 1]} : vector<4x8x32xf32> to vector<1x8x32xf32>
    %41 = vector.shape_cast %40 : vector<1x8x32xf32> to vector<8x32xf32>
    %42 = vector.extract_strided_slice %35 {offsets = [3, 0, 0], sizes = [1, 8, 32], strides = [1, 1, 1]} : vector<4x8x32xf32> to vector<1x8x32xf32>
    %43 = vector.shape_cast %42 : vector<1x8x32xf32> to vector<8x32xf32>
    %44 = tpu.concatenate %37, %39, %41, %43 in 1 : vector<8x32xf32>, vector<8x32xf32>, vector<8x32xf32>, vector<8x32xf32> -> vector<8x128xf32>
    %c0_18 = arith.constant 0 : index
    %c0_19 = arith.constant 0 : index
    %45 = vector.load %arg5[%c0_18, %c0_19] : memref<128x128xf32, #tpu.memory_space<vmem>>, vector<128x128xf32>
    %cst_20 = arith.constant dense<0.000000e+00> : vector<8x128xf32>
    %46 = tpu.matmul %44, %45, %cst_20 {dimension_numbers = #tpu.dot_dimension_numbers<[1], [0], [0], [1], [0, 0, 1, 1], [], []>} : vector<8x128xf32>, vector<128x128xf32>, vector<8x128xf32> -> vector<8x128xf32>
    %c0_21 = arith.constant 0 : index
    %c0_22 = arith.constant 0 : index
    %47 = vector.load %arg6[%c0_21, %c0_22] : memref<1x128xf32, #tpu.memory_space<vmem>>, vector<1x128xf32>
    %48 = vector.broadcast %47 : vector<1x128xf32> to vector<8x128xf32>
    %49 = arith.addf %46, %48 : vector<8x128xf32>
    %c0_23 = arith.constant 0 : index
    %c0_24 = arith.constant 0 : index
    %50 = vector.load %arg13[%c0_23, %c0_24] : memref<1x128xf32, #tpu.memory_space<vmem>>, vector<1x128xf32>
    %c0_25 = arith.constant 0 : index
    %c0_26 = arith.constant 0 : index
    %51 = vector.load %arg14[%c0_25, %c0_26] : memref<1x128xf32, #tpu.memory_space<vmem>>, vector<1x128xf32>
    %52 = arith.addf %49, %0 : vector<8x128xf32>
    %cst_27 = arith.constant dense<0.000000e+00> : vector<8xf32>
    %53 = vector.multi_reduction <add>, %52, %cst_27 [1] : vector<8x128xf32> to vector<8xf32>
    %54 = vector.shape_cast %53 : vector<8xf32> to vector<8x1xf32>
    %cst_28 = arith.constant 1.280000e+02 : f32
    %55 = vector.broadcast %cst_28 : f32 to vector<8x1xf32>
    %56 = arith.divf %54, %55 : vector<8x1xf32>
    %57 = vector.broadcast %56 : vector<8x1xf32> to vector<8x128xf32>
    %58 = arith.subf %52, %57 : vector<8x128xf32>
    %59 = arith.mulf %58, %58 : vector<8x128xf32>
    %cst_29 = arith.constant dense<0.000000e+00> : vector<8xf32>
    %60 = vector.multi_reduction <add>, %59, %cst_29 [1] : vector<8x128xf32> to vector<8xf32>
    %61 = vector.shape_cast %60 : vector<8xf32> to vector<8x1xf32>
    %cst_30 = arith.constant 1.280000e+02 : f32
    %62 = vector.broadcast %cst_30 : f32 to vector<8x1xf32>
    %63 = arith.divf %61, %62 : vector<8x1xf32>
    %cst_31 = arith.constant 9.99999974E-6 : f32
    %64 = vector.broadcast %cst_31 : f32 to vector<8x1xf32>
    %65 = arith.addf %63, %64 : vector<8x1xf32>
    %66 = math.rsqrt %65 : vector<8x1xf32>
    %67 = vector.broadcast %66 : vector<8x1xf32> to vector<8x128xf32>
    %68 = arith.mulf %58, %67 : vector<8x128xf32>
    %69 = vector.broadcast %50 : vector<1x128xf32> to vector<8x128xf32>
    %70 = arith.mulf %68, %69 : vector<8x128xf32>
    %71 = vector.broadcast %51 : vector<1x128xf32> to vector<8x128xf32>
    %72 = arith.addf %70, %71 : vector<8x128xf32>
    %c0_32 = arith.constant 0 : index
    %c0_33 = arith.constant 0 : index
    %73 = vector.load %arg7[%c0_32, %c0_33] : memref<128x128xf32, #tpu.memory_space<vmem>>, vector<128x128xf32>
    %cst_34 = arith.constant dense<0.000000e+00> : vector<8x128xf32>
    %74 = tpu.matmul %72, %73, %cst_34 {dimension_numbers = #tpu.dot_dimension_numbers<[1], [0], [0], [1], [0, 0, 1, 1], [], []>} : vector<8x128xf32>, vector<128x128xf32>, vector<8x128xf32> -> vector<8x128xf32>
    %c0_35 = arith.constant 0 : index
    %c0_36 = arith.constant 0 : index
    %75 = vector.load %arg8[%c0_35, %c0_36] : memref<1x128xf32, #tpu.memory_space<vmem>>, vector<1x128xf32>
    %76 = vector.broadcast %75 : vector<1x128xf32> to vector<8x128xf32>
    %77 = arith.addf %74, %76 : vector<8x128xf32>
    %cst_37 = arith.constant 0.000000e+00 : f32
    %78 = vector.broadcast %cst_37 : f32 to vector<8x128xf32>
    %79 = arith.maximumf %77, %78 : vector<8x128xf32>
    %c0_38 = arith.constant 0 : index
    %c0_39 = arith.constant 0 : index
    %80 = vector.load %arg9[%c0_38, %c0_39] : memref<128x128xf32, #tpu.memory_space<vmem>>, vector<128x128xf32>
    %cst_40 = arith.constant dense<0.000000e+00> : vector<8x128xf32>
    %81 = tpu.matmul %79, %80, %cst_40 {dimension_numbers = #tpu.dot_dimension_numbers<[1], [0], [0], [1], [0, 0, 1, 1], [], []>} : vector<8x128xf32>, vector<128x128xf32>, vector<8x128xf32> -> vector<8x128xf32>
    %c0_41 = arith.constant 0 : index
    %c0_42 = arith.constant 0 : index
    %82 = vector.load %arg10[%c0_41, %c0_42] : memref<1x128xf32, #tpu.memory_space<vmem>>, vector<1x128xf32>
    %83 = vector.broadcast %82 : vector<1x128xf32> to vector<8x128xf32>
    %84 = arith.addf %81, %83 : vector<8x128xf32>
    %cst_43 = arith.constant 0.000000e+00 : f32
    %85 = vector.broadcast %cst_43 : f32 to vector<8x128xf32>
    %86 = arith.maximumf %84, %85 : vector<8x128xf32>
    %c0_44 = arith.constant 0 : index
    %c0_45 = arith.constant 0 : index
    %87 = vector.load %arg11[%c0_44, %c0_45] : memref<128x128xf32, #tpu.memory_space<vmem>>, vector<128x128xf32>
    %cst_46 = arith.constant dense<0.000000e+00> : vector<8x128xf32>
    %88 = tpu.matmul %86, %87, %cst_46 {dimension_numbers = #tpu.dot_dimension_numbers<[1], [0], [0], [1], [0, 0, 1, 1], [], []>} : vector<8x128xf32>, vector<128x128xf32>, vector<8x128xf32> -> vector<8x128xf32>
    %c0_47 = arith.constant 0 : index
    %c0_48 = arith.constant 0 : index
    %89 = vector.load %arg12[%c0_47, %c0_48] : memref<1x128xf32, #tpu.memory_space<vmem>>, vector<1x128xf32>
    %90 = vector.broadcast %89 : vector<1x128xf32> to vector<8x128xf32>
    %91 = arith.addf %88, %90 : vector<8x128xf32>
    %92 = arith.addf %91, %72 : vector<8x128xf32>
    %cst_49 = arith.constant dense<0.000000e+00> : vector<8xf32>
    %93 = vector.multi_reduction <add>, %92, %cst_49 [1] : vector<8x128xf32> to vector<8xf32>
    %94 = vector.shape_cast %93 : vector<8xf32> to vector<8x1xf32>
    %cst_50 = arith.constant 1.280000e+02 : f32
    %95 = vector.broadcast %cst_50 : f32 to vector<8x1xf32>
    %96 = arith.divf %94, %95 : vector<8x1xf32>
    %97 = vector.broadcast %96 : vector<8x1xf32> to vector<8x128xf32>
    %98 = arith.subf %92, %97 : vector<8x128xf32>
    %99 = arith.mulf %98, %98 : vector<8x128xf32>
    %cst_51 = arith.constant dense<0.000000e+00> : vector<8xf32>
    %100 = vector.multi_reduction <add>, %99, %cst_51 [1] : vector<8x128xf32> to vector<8xf32>
    %101 = vector.shape_cast %100 : vector<8xf32> to vector<8x1xf32>
    %cst_52 = arith.constant 1.280000e+02 : f32
    %102 = vector.broadcast %cst_52 : f32 to vector<8x1xf32>
    %103 = arith.divf %101, %102 : vector<8x1xf32>
    %cst_53 = arith.constant 9.99999974E-6 : f32
    %104 = vector.broadcast %cst_53 : f32 to vector<8x1xf32>
    %105 = arith.addf %103, %104 : vector<8x1xf32>
    %106 = math.rsqrt %105 : vector<8x1xf32>
    %107 = vector.broadcast %106 : vector<8x1xf32> to vector<8x128xf32>
    %108 = arith.mulf %98, %107 : vector<8x128xf32>
    %109 = vector.broadcast %50 : vector<1x128xf32> to vector<8x128xf32>
    %110 = arith.mulf %108, %109 : vector<8x128xf32>
    %111 = vector.broadcast %51 : vector<1x128xf32> to vector<8x128xf32>
    %112 = arith.addf %110, %111 : vector<8x128xf32>
    %c0_54 = arith.constant 0 : index
    %c0_55 = arith.constant 0 : index
    %113 = vector.load %arg15[%c0_54, %c0_55] : memref<8x128xf32, #tpu.memory_space<vmem>>, vector<8x128xf32>
    tpu.vector_store %arg15[%c0_54, %c0_55], %112 {strides = array<i32>} : memref<8x128xf32, #tpu.memory_space<vmem>>, vector<8x128xf32>,
    return
  }
  func.func @transform_0(%arg0: i32) -> (i32, i32, i32) {
    %c0_i32 = arith.constant 0 : i32
    %c0_i32_0 = arith.constant 0 : i32
    %c0_i32_1 = arith.constant 0 : i32
    return %arg0, %c0_i32, %c0_i32_0 : i32, i32, i32
  }
  func.func @transform_1(%arg0: i32) -> (i32, i32) {
    %c0_i32 = arith.constant 0 : i32
    %c0_i32_0 = arith.constant 0 : i32
    return %arg0, %c0_i32 : i32, i32
  }
  func.func @transform_2(%arg0: i32) -> (i32, i32, i32) {
    %c0_i32 = arith.constant 0 : i32
    %c0_i32_0 = arith.constant 0 : i32
    %c0_i32_1 = arith.constant 0 : i32
    %c0_i32_2 = arith.constant 0 : i32
    return %c0_i32, %c0_i32_0, %c0_i32_1 : i32, i32, i32
  }
  func.func @transform_3(%arg0: i32) -> (i32, i32, i32) {
    %c0_i32 = arith.constant 0 : i32
    %c0_i32_0 = arith.constant 0 : i32
    %c0_i32_1 = arith.constant 0 : i32
    %c0_i32_2 = arith.constant 0 : i32
    return %c0_i32, %c0_i32_0, %c0_i32_1 : i32, i32, i32
  }
  func.func @transform_4(%arg0: i32) -> (i32, i32) {
    %c0_i32 = arith.constant 0 : i32
    %c0_i32_0 = arith.constant 0 : i32
    %c0_i32_1 = arith.constant 0 : i32
    return %c0_i32, %c0_i32_0 : i32, i32
  }
  func.func @transform_5(%arg0: i32) -> (i32, i32) {
    %c0_i32 = arith.constant 0 : i32
    %c0_i32_0 = arith.constant 0 : i32
    %c0_i32_1 = arith.constant 0 : i32
    return %c0_i32, %c0_i32_0 : i32, i32
  }
  func.func @transform_6(%arg0: i32) -> (i32, i32) {
    %c0_i32 = arith.constant 0 : i32
    %c0_i32_0 = arith.constant 0 : i32
    %c0_i32_1 = arith.constant 0 : i32
    return %c0_i32, %c0_i32_0 : i32, i32
  }
  func.func @transform_7(%arg0: i32) -> (i32, i32) {
    %c0_i32 = arith.constant 0 : i32
    %c0_i32_0 = arith.constant 0 : i32
    %c0_i32_1 = arith.constant 0 : i32
    return %c0_i32, %c0_i32_0 : i32, i32
  }
  func.func @transform_8(%arg0: i32) -> (i32, i32) {
    %c0_i32 = arith.constant 0 : i32
    %c0_i32_0 = arith.constant 0 : i32
    %c0_i32_1 = arith.constant 0 : i32
    return %c0_i32, %c0_i32_0 : i32, i32
  }
  func.func @transform_9(%arg0: i32) -> (i32, i32) {
    %c0_i32 = arith.constant 0 : i32
    %c0_i32_0 = arith.constant 0 : i32
    %c0_i32_1 = arith.constant 0 : i32
    return %c0_i32, %c0_i32_0 : i32, i32
  }
  func.func @transform_10(%arg0: i32) -> (i32, i32) {
    %c0_i32 = arith.constant 0 : i32
    %c0_i32_0 = arith.constant 0 : i32
    %c0_i32_1 = arith.constant 0 : i32
    return %c0_i32, %c0_i32_0 : i32, i32
  }
  func.func @transform_11(%arg0: i32) -> (i32, i32) {
    %c0_i32 = arith.constant 0 : i32
    %c0_i32_0 = arith.constant 0 : i32
    %c0_i32_1 = arith.constant 0 : i32
    return %c0_i32, %c0_i32_0 : i32, i32
  }
  func.func @transform_12(%arg0: i32) -> (i32, i32) {
    %c0_i32 = arith.constant 0 : i32
    %c0_i32_0 = arith.constant 0 : i32
    %c0_i32_1 = arith.constant 0 : i32
    return %c0_i32, %c0_i32_0 : i32, i32
  }
  func.func @transform_13(%arg0: i32) -> (i32, i32) {
    %c0_i32 = arith.constant 0 : i32
    %c0_i32_0 = arith.constant 0 : i32
    %c0_i32_1 = arith.constant 0 : i32
    return %c0_i32, %c0_i32_0 : i32, i32
  }
  func.func @transform_14(%arg0: i32) -> (i32, i32) {
    %c0_i32 = arith.constant 0 : i32
    %c0_i32_0 = arith.constant 0 : i32
    return %arg0, %c0_i32 : i32, i32
  }
}

</mosaic_0001>

<llo_original>
// kernel: tpu_custom_call.1
$region0: #{tpu_custom_call.1}
  #allocation0 [shape = 'u32[]', space=smem, size = 0x4, offset = 0x4, fixed_abs, tag = 'smem constant byte address 0x4 - core index']
  #allocation1 [shape = 'u32[72,128]{1,0:T(1,128)}', space=vmem, size = 0x9000, scoped, tag = 'internal scratch']
  %s0 = inlined_call_operand.vmem [shape: f32[2,1,8], index: 0, kind: input, shape index: {}]
  %s1 = inlined_call_operand.vmem [shape: f32[16,128], index: 1, kind: input, shape index: {}]
  %s2 = inlined_call_operand.vmem [shape: f32[12,128,32], index: 2, kind: input, shape index: {}]
  %s3 = inlined_call_operand.vmem [shape: f32[12,1,32], index: 3, kind: input, shape index: {}]
  %s4 = inlined_call_operand.vmem [shape: f32[128,128], index: 4, kind: input, shape index: {}]
  %s5 = inlined_call_operand.vmem [shape: f32[1,128], index: 5, kind: input, shape index: {}]
  %s6 = inlined_call_operand.vmem [shape: f32[128,128], index: 6, kind: input, shape index: {}]
  %s7 = inlined_call_operand.vmem [shape: f32[1,128], index: 7, kind: input, shape index: {}]
  %s8 = inlined_call_operand.vmem [shape: f32[128,128], index: 8, kind: input, shape index: {}]
  %s9 = inlined_call_operand.vmem [shape: f32[1,128], index: 9, kind: input, shape index: {}]
  %s10 = inlined_call_operand.vmem [shape: f32[128,128], index: 10, kind: input, shape index: {}]
  %s11 = inlined_call_operand.vmem [shape: f32[1,128], index: 11, kind: input, shape index: {}]
  %s12 = inlined_call_operand.vmem [shape: f32[1,128], index: 12, kind: input, shape index: {}]
  %s13 = inlined_call_operand.vmem [shape: f32[1,128], index: 13, kind: input, shape index: {}]
  %s14 = inlined_call_operand.hbm [shape: f32[16,128], index: 14, kind: output, shape index: {}]
  %s15 = sld [smem:[#allocation0]]
  $region89: #{tpu_custom_call.1} parent=0
    _
  %s17 = ssub.s32 1, %s15
  %s18 = scalar_select 0, %s17, %s15
  $region1: #{tpu_custom_call.1} parent=0
    #allocation2 [shape = 'u8[8192]{0}', space=vmem, size = 0x2000, scoped, tag = 'output window, operand 0']
    #allocation3 [shape = 's32[2]{0}', space=sflag, size = 0x8, scoped, tag = 'scoped memory for tpu_custom_call.1']
    %19 = vsyncpa [#allocation3], 0
    %s20 = scalar_lea.sflag [#allocation3], 1
    %21 = vsyncpa %s20, 0
    loop: start=0, step=1, limit=4
    $region2: #{tpu_custom_call.1} parent=1 // loop_pre_header
      _
    $region3: #{tpu_custom_call.1} parent=1 // loop_header
      %s23 = sphi 0, %s27
      %p24 = scmp.ge.s32.totalorder %s23, 4
      %s33 = sphi 0, %s35
      %s36 = sphi 0, %s33
      %s37 = sphi 0, %s36
      %s53 = sphi 0, %s37
      %s59 = sphi 0, %s61
      %s62 = sphi 0, %s59
      %s63 = sphi 0, %s62
      %s79 = sphi 0, %s63
      %s83 = sphi 0, %s83
      %s85 = sphi 0, %s83
      %s86 = sphi 0, %s85
      %s100 = sphi 0, %s86
      %s104 = sphi 0, %s104
      %s106 = sphi 0, %s104
      %s107 = sphi 0, %s106
      %s121 = sphi 0, %s107
      %s125 = sphi 0, %s125
      %s127 = sphi 0, %s125
      %s128 = sphi 0, %s127
      %s142 = sphi 0, %s128
      %s146 = sphi 0, %s146
      %s148 = sphi 0, %s146
      %s149 = sphi 0, %s148
      %s163 = sphi 0, %s149
      %s167 = sphi 0, %s167
      %s169 = sphi 0, %s167
      %s170 = sphi 0, %s169
      %s184 = sphi 0, %s170
      %s188 = sphi 0, %s188
      %s190 = sphi 0, %s188
      %s191 = sphi 0, %s190
      %s205 = sphi 0, %s191
      %s209 = sphi 0, %s209
      %s211 = sphi 0, %s209
      %s212 = sphi 0, %s211
      %s226 = sphi 0, %s212
      %s230 = sphi 0, %s230
      %s232 = sphi 0, %s230
      %s233 = sphi 0, %s232
      %s247 = sphi 0, %s233
      %s251 = sphi 0, %s251
      %s253 = sphi 0, %s251
      %s254 = sphi 0, %s253
      %s268 = sphi 0, %s254
      %s272 = sphi 0, %s272
      %s274 = sphi 0, %s272
      %s275 = sphi 0, %s274
      %s289 = sphi 0, %s275
      %s293 = sphi 0, %s293
      %s295 = sphi 0, %s293
      %s296 = sphi 0, %s295
      %s310 = sphi 0, %s296
      %s314 = sphi 0, %s314
      %s316 = sphi 0, %s314
      %s317 = sphi 0, %s316
      %s331 = sphi 0, %s317
      %s337 = sphi 0, %s339
      %s340 = sphi 0, %s337
      %s341 = sphi 0, %s340
      %s357 = sphi 0, %s341
    $region4: #{tpu_custom_call.1} parent=1 // loop_header_branch
      %26 = sbr.rel (%p24) target = $region8
    $region5: #{tpu_custom_call.1} parent=1 // loop_body
      %s28 = ssub.s32 %s23, 1
      %s29 = ssub.s32 %s23, 2
      %s30 = sadd.s32 %s23, 1
      %s31 = ssub.s32 %s23, %s30
      %p32 = scmp.eq.s32.totalorder %s31, 0
      %s34 = sadd.s32 %s33, 1
      %s35 = scalar_select %p32, %s33, %s34
      %p38 = pneg %p32
      %p39 = scmp.eq.s32.totalorder %s23, 1
      %p40 = por %p38, %p39
      %p41 = scmp.ne.s32.totalorder %s33, %s36
      %p42 = scmp.eq.s32.totalorder %s23, 0
      %p43 = por %p41, %p42
      %p44 = scmp.ne.s32.totalorder %s33, %s36
      %p45 = scmp.eq.s32.totalorder %s28, 1
      %p46 = por %p44, %p45
      %p47 = scmp.ne.s32.totalorder %s36, %s37
      %p48 = scmp.eq.s32.totalorder %s28, 0
      %p49 = por %p47, %p48
      %p50 = scmp.ne.s32.totalorder %s36, %s37
      %p51 = scmp.eq.s32.totalorder %s29, 1
      %p52 = por %p50, %p51
      %p54 = scmp.ne.s32.totalorder %s37, %s53
      %p55 = scmp.eq.s32.totalorder %s29, 0
      %p56 = por %p54, %p55
      %s57 = ssub.s32 %s23, %s30
      %p58 = scmp.eq.s32.totalorder %s57, 0
      %s60 = sadd.s32 %s59, 1
      %s61 = scalar_select %p58, %s59, %s60
      %p64 = pneg %p58
      %p65 = scmp.eq.s32.totalorder %s23, 1
      %p66 = por %p64, %p65
      %p67 = scmp.ne.s32.totalorder %s59, %s62
      %p68 = scmp.eq.s32.totalorder %s23, 0
      %p69 = por %p67, %p68
      %p70 = scmp.ne.s32.totalorder %s59, %s62
      %p71 = scmp.eq.s32.totalorder %s28, 1
      %p72 = por %p70, %p71
      %p73 = scmp.ne.s32.totalorder %s62, %s63
      %p74 = scmp.eq.s32.totalorder %s28, 0
      %p75 = por %p73, %p74
      %p76 = scmp.ne.s32.totalorder %s62, %s63
      %p77 = scmp.eq.s32.totalorder %s29, 1
      %p78 = por %p76, %p77
      %p80 = scmp.ne.s32.totalorder %s63, %s79
      %p81 = scmp.eq.s32.totalorder %s29, 0
      %p82 = por %p80, %p81
      %s84 = sadd.s32 %s83, 1
      %p87 = scmp.eq.s32.totalorder %s23, 1
      %p88 = scmp.ne.s32.totalorder %s83, %s85
      %p89 = scmp.eq.s32.totalorder %s23, 0
      %p90 = por %p88, %p89
      %p91 = scmp.ne.s32.totalorder %s83, %s85
      %p92 = scmp.eq.s32.totalorder %s28, 1
      %p93 = por %p91, %p92
      %p94 = scmp.ne.s32.totalorder %s85, %s86
      %p95 = scmp.eq.s32.totalorder %s28, 0
      %p96 = por %p94, %p95
      %p97 = scmp.ne.s32.totalorder %s85, %s86
      %p98 = scmp.eq.s32.totalorder %s29, 1
      %p99 = por %p97, %p98
      %p101 = scmp.ne.s32.totalorder %s86, %s100
      %p102 = scmp.eq.s32.totalorder %s29, 0
      %p103 = por %p101, %p102
      %s105 = sadd.s32 %s104, 1
      %p108 = scmp.eq.s32.totalorder %s23, 1
      %p109 = scmp.ne.s32.totalorder %s104, %s106
      %p110 = scmp.eq.s32.totalorder %s23, 0
      %p111 = por %p109, %p110
      %p112 = scmp.ne.s32.totalorder %s104, %s106
      %p113 = scmp.eq.s32.totalorder %s28, 1
      %p114 = por %p112, %p113
      %p115 = scmp.ne.s32.totalorder %s106, %s107
      %p116 = scmp.eq.s32.totalorder %s28, 0
      %p117 = por %p115, %p116
      %p118 = scmp.ne.s32.totalorder %s106, %s107
      %p119 = scmp.eq.s32.totalorder %s29, 1
      %p120 = por %p118, %p119
      %p122 = scmp.ne.s32.totalorder %s107, %s121
      %p123 = scmp.eq.s32.totalorder %s29, 0
      %p124 = por %p122, %p123
      %s126 = sadd.s32 %s125, 1
      %p129 = scmp.eq.s32.totalorder %s23, 1
      %p130 = scmp.ne.s32.totalorder %s125, %s127
      %p131 = scmp.eq.s32.totalorder %s23, 0
      %p132 = por %p130, %p131
      %p133 = scmp.ne.s32.totalorder %s125, %s127
      %p134 = scmp.eq.s32.totalorder %s28, 1
      %p135 = por %p133, %p134
      %p136 = scmp.ne.s32.totalorder %s127, %s128
      %p137 = scmp.eq.s32.totalorder %s28, 0
      %p138 = por %p136, %p137
      %p139 = scmp.ne.s32.totalorder %s127, %s128
      %p140 = scmp.eq.s32.totalorder %s29, 1
      %p141 = por %p139, %p140
      %p143 = scmp.ne.s32.totalorder %s128, %s142
      %p144 = scmp.eq.s32.totalorder %s29, 0
      %p145 = por %p143, %p144
      %s147 = sadd.s32 %s146, 1
      %p150 = scmp.eq.s32.totalorder %s23, 1
      %p151 = scmp.ne.s32.totalorder %s146, %s148
      %p152 = scmp.eq.s32.totalorder %s23, 0
      %p153 = por %p151, %p152
      %p154 = scmp.ne.s32.totalorder %s146, %s148
      %p155 = scmp.eq.s32.totalorder %s28, 1
      %p156 = por %p154, %p155
      %p157 = scmp.ne.s32.totalorder %s148, %s149
      %p158 = scmp.eq.s32.totalorder %s28, 0
      %p159 = por %p157, %p158
      %p160 = scmp.ne.s32.totalorder %s148, %s149
      %p161 = scmp.eq.s32.totalorder %s29, 1
      %p162 = por %p160, %p161
      %p164 = scmp.ne.s32.totalorder %s149, %s163
      %p165 = scmp.eq.s32.totalorder %s29, 0
      %p166 = por %p164, %p165
      %s168 = sadd.s32 %s167, 1
      %p171 = scmp.eq.s32.totalorder %s23, 1
      %p172 = scmp.ne.s32.totalorder %s167, %s169
      %p173 = scmp.eq.s32.totalorder %s23, 0
      %p174 = por %p172, %p173
      %p175 = scmp.ne.s32.totalorder %s167, %s169
      %p176 = scmp.eq.s32.totalorder %s28, 1
      %p177 = por %p175, %p176
      %p178 = scmp.ne.s32.totalorder %s169, %s170
      %p179 = scmp.eq.s32.totalorder %s28, 0
      %p180 = por %p178, %p179
      %p181 = scmp.ne.s32.totalorder %s169, %s170
      %p182 = scmp.eq.s32.totalorder %s29, 1
      %p183 = por %p181, %p182
      %p185 = scmp.ne.s32.totalorder %s170, %s184
      %p186 = scmp.eq.s32.totalorder %s29, 0
      %p187 = por %p185, %p186
      %s189 = sadd.s32 %s188, 1
      %p192 = scmp.eq.s32.totalorder %s23, 1
      %p193 = scmp.ne.s32.totalorder %s188, %s190
      %p194 = scmp.eq.s32.totalorder %s23, 0
      %p195 = por %p193, %p194
      %p196 = scmp.ne.s32.totalorder %s188, %s190
      %p197 = scmp.eq.s32.totalorder %s28, 1
      %p198 = por %p196, %p197
      %p199 = scmp.ne.s32.totalorder %s190, %s191
      %p200 = scmp.eq.s32.totalorder %s28, 0
      %p201 = por %p199, %p200
      %p202 = scmp.ne.s32.totalorder %s190, %s191
      %p203 = scmp.eq.s32.totalorder %s29, 1
      %p204 = por %p202, %p203
      %p206 = scmp.ne.s32.totalorder %s191, %s205
      %p207 = scmp.eq.s32.totalorder %s29, 0
      %p208 = por %p206, %p207
      %s210 = sadd.s32 %s209, 1
      %p213 = scmp.eq.s32.totalorder %s23, 1
      %p214 = scmp.ne.s32.totalorder %s209, %s211
      %p215 = scmp.eq.s32.totalorder %s23, 0
      %p216 = por %p214, %p215
      %p217 = scmp.ne.s32.totalorder %s209, %s211
      %p218 = scmp.eq.s32.totalorder %s28, 1
      %p219 = por %p217, %p218
      %p220 = scmp.ne.s32.totalorder %s211, %s212
      %p221 = scmp.eq.s32.totalorder %s28, 0
      %p222 = por %p220, %p221
      %p223 = scmp.ne.s32.totalorder %s211, %s212
      %p224 = scmp.eq.s32.totalorder %s29, 1
      %p225 = por %p223, %p224
      %p227 = scmp.ne.s32.totalorder %s212, %s226
      %p228 = scmp.eq.s32.totalorder %s29, 0
      %p229 = por %p227, %p228
      %s231 = sadd.s32 %s230, 1
      %p234 = scmp.eq.s32.totalorder %s23, 1
      %p235 = scmp.ne.s32.totalorder %s230, %s232
      %p236 = scmp.eq.s32.totalorder %s23, 0
      %p237 = por %p235, %p236
      %p238 = scmp.ne.s32.totalorder %s230, %s232
      %p239 = scmp.eq.s32.totalorder %s28, 1
      %p240 = por %p238, %p239
      %p241 = scmp.ne.s32.totalorder %s232, %s233
      %p242 = scmp.eq.s32.totalorder %s28, 0
      %p243 = por %p241, %p242
      %p244 = scmp.ne.s32.totalorder %s232, %s233
      %p245 = scmp.eq.s32.totalorder %s29, 1
      %p246 = por %p244, %p245
      %p248 = scmp.ne.s32.totalorder %s233, %s247
      %p249 = scmp.eq.s32.totalorder %s29, 0
      %p250 = por %p248, %p249
      %s252 = sadd.s32 %s251, 1
      %p255 = scmp.eq.s32.totalorder %s23, 1
      %p256 = scmp.ne.s32.totalorder %s251, %s253
      %p257 = scmp.eq.s32.totalorder %s23, 0
      %p258 = por %p256, %p257
      %p259 = scmp.ne.s32.totalorder %s251, %s253
      %p260 = scmp.eq.s32.totalorder %s28, 1
      %p261 = por %p259, %p260
      %p262 = scmp.ne.s32.totalorder %s253, %s254
      %p263 = scmp.eq.s32.totalorder %s28, 0
      %p264 = por %p262, %p263
      %p265 = scmp.ne.s32.totalorder %s253, %s254
      %p266 = scmp.eq.s32.totalorder %s29, 1
      %p267 = por %p265, %p266
      %p269 = scmp.ne.s32.totalorder %s254, %s268
      %p270 = scmp.eq.s32.totalorder %s29, 0
      %p271 = por %p269, %p270
      %s273 = sadd.s32 %s272, 1
      %p276 = scmp.eq.s32.totalorder %s23, 1
      %p277 = scmp.ne.s32.totalorder %s272, %s274
      %p278 = scmp.eq.s32.totalorder %s23, 0
      %p279 = por %p277, %p278
      %p280 = scmp.ne.s32.totalorder %s272, %s274
      %p281 = scmp.eq.s32.totalorder %s28, 1
      %p282 = por %p280, %p281
      %p283 = scmp.ne.s32.totalorder %s274, %s275
      %p284 = scmp.eq.s32.totalorder %s28, 0
      %p285 = por %p283, %p284
      %p286 = scmp.ne.s32.totalorder %s274, %s275
      %p287 = scmp.eq.s32.totalorder %s29, 1
      %p288 = por %p286, %p287
      %p290 = scmp.ne.s32.totalorder %s275, %s289
      %p291 = scmp.eq.s32.totalorder %s29, 0
      %p292 = por %p290, %p291
      %s294 = sadd.s32 %s293, 1
      %p297 = scmp.eq.s32.totalorder %s23, 1
      %p298 = scmp.ne.s32.totalorder %s293, %s295
      %p299 = scmp.eq.s32.totalorder %s23, 0
      %p300 = por %p298, %p299
      %p301 = scmp.ne.s32.totalorder %s293, %s295
      %p302 = scmp.eq.s32.totalorder %s28, 1
      %p303 = por %p301, %p302
      %p304 = scmp.ne.s32.totalorder %s295, %s296
      %p305 = scmp.eq.s32.totalorder %s28, 0
      %p306 = por %p304, %p305
      %p307 = scmp.ne.s32.totalorder %s295, %s296
      %p308 = scmp.eq.s32.totalorder %s29, 1
      %p309 = por %p307, %p308
      %p311 = scmp.ne.s32.totalorder %s296, %s310
      %p312 = scmp.eq.s32.totalorder %s29, 0
      %p313 = por %p311, %p312
      %s315 = sadd.s32 %s314, 1
      %p318 = scmp.eq.s32.totalorder %s23, 1
      %p319 = scmp.ne.s32.totalorder %s314, %s316
      %p320 = scmp.eq.s32.totalorder %s23, 0
      %p321 = por %p319, %p320
      %p322 = scmp.ne.s32.totalorder %s314, %s316
      %p323 = scmp.eq.s32.totalorder %s28, 1
      %p324 = por %p322, %p323
      %p325 = scmp.ne.s32.totalorder %s316, %s317
      %p326 = scmp.eq.s32.totalorder %s28, 0
      %p327 = por %p325, %p326
      %p328 = scmp.ne.s32.totalorder %s316, %s317
      %p329 = scmp.eq.s32.totalorder %s29, 1
      %p330 = por %p328, %p329
      %p332 = scmp.ne.s32.totalorder %s317, %s331
      %p333 = scmp.eq.s32.totalorder %s29, 0
      %p334 = por %p332, %p333
      %s335 = ssub.s32 %s23, %s30
      %p336 = scmp.eq.s32.totalorder %s335, 0
      %s338 = sadd.s32 %s337, 1
      %s339 = scalar_select %p336, %s337, %s338
      %p342 = pneg %p336
      %p343 = scmp.eq.s32.totalorder %s23, 1
      %p344 = por %p342, %p343
      %p345 = scmp.ne.s32.totalorder %s337, %s340
      %p346 = scmp.eq.s32.totalorder %s23, 0
      %p347 = por %p345, %p346
      %p348 = scmp.ne.s32.totalorder %s337, %s340
      %p349 = scmp.eq.s32.totalorder %s28, 1
      %p350 = por %p348, %p349
      %p351 = scmp.ne.s32.totalorder %s340, %s341
      %p352 = scmp.eq.s32.totalorder %s28, 0
      %p353 = por %p351, %p352
      %p354 = scmp.ne.s32.totalorder %s340, %s341
      %p355 = scmp.eq.s32.totalorder %s29, 1
      %p356 = por %p354, %p355
      %p358 = scmp.ne.s32.totalorder %s341, %s357
      %p359 = scmp.eq.s32.totalorder %s29, 0
      %p360 = por %p358, %p359
      %p361 = scmp.le.s32.totalorder 1, %s23
      %p362 = scmp.lt.s32.totalorder %s23, 3
      %p363 = pnand %p361, %p362
      %p364 = pneg %p363
      // Predicated region
      $region9: #{tpu_custom_call.1} parent=5 // pred_check
        _
      $region10: #{tpu_custom_call.1} parent=5 // pred_check_branch
        %366 = sbr.rel (%p363) target = $region12
      $region11: #{tpu_custom_call.1} parent=5 // pred_region
        %s367 = ssub.s32 %s23, 1
        // Predicated region
        $region13: #{tpu_custom_call.1} parent=11 // pred_check
          %p368 = pneg %p96
        $region14: #{tpu_custom_call.1} parent=11 // pred_check_branch
          %370 = sbr.rel (%p368) target = $region16
        $region15: #{tpu_custom_call.1} parent=11 // pred_region
          _
        $region16: #{tpu_custom_call.1} parent=11 // pred_fallthru
          _
        // Predicated region
        $region17: #{tpu_custom_call.1} parent=11 // pred_check
          %p371 = pneg %p117
        $region18: #{tpu_custom_call.1} parent=11 // pred_check_branch
          %373 = sbr.rel (%p371) target = $region20
        $region19: #{tpu_custom_call.1} parent=11 // pred_region
          _
        $region20: #{tpu_custom_call.1} parent=11 // pred_fallthru
          _
        // Predicated region
        $region21: #{tpu_custom_call.1} parent=11 // pred_check
          %p374 = pneg %p138
        $region22: #{tpu_custom_call.1} parent=11 // pred_check_branch
          %376 = sbr.rel (%p374) target = $region24
        $region23: #{tpu_custom_call.1} parent=11 // pred_region
          _
        $region24: #{tpu_custom_call.1} parent=11 // pred_fallthru
          _
        // Predicated region
        $region25: #{tpu_custom_call.1} parent=11 // pred_check
          %p377 = pneg %p159
        $region26: #{tpu_custom_call.1} parent=11 // pred_check_branch
          %379 = sbr.rel (%p377) target = $region28
        $region27: #{tpu_custom_call.1} parent=11 // pred_region
          _
        $region28: #{tpu_custom_call.1} parent=11 // pred_fallthru
          _
        // Predicated region
        $region29: #{tpu_custom_call.1} parent=11 // pred_check
          %p380 = pneg %p180
        $region30: #{tpu_custom_call.1} parent=11 // pred_check_branch
          %382 = sbr.rel (%p380) target = $region32
        $region31: #{tpu_custom_call.1} parent=11 // pred_region
          _
        $region32: #{tpu_custom_call.1} parent=11 // pred_fallthru
          _
        // Predicated region
        $region33: #{tpu_custom_call.1} parent=11 // pred_check
          %p383 = pneg %p201
        $region34: #{tpu_custom_call.1} parent=11 // pred_check_branch
          %385 = sbr.rel (%p383) target = $region36
        $region35: #{tpu_custom_call.1} parent=11 // pred_region
          _
        $region36: #{tpu_custom_call.1} parent=11 // pred_fallthru
          _
        // Predicated region
        $region37: #{tpu_custom_call.1} parent=11 // pred_check
          %p386 = pneg %p222
        $region38: #{tpu_custom_call.1} parent=11 // pred_check_branch
          %388 = sbr.rel (%p386) target = $region40
        $region39: #{tpu_custom_call.1} parent=11 // pred_region
          _
        $region40: #{tpu_custom_call.1} parent=11 // pred_fallthru
          _
        // Predicated region
        $region41: #{tpu_custom_call.1} parent=11 // pred_check
          %p389 = pneg %p243
        $region42: #{tpu_custom_call.1} parent=11 // pred_check_branch
          %391 = sbr.rel (%p389) target = $region44
        $region43: #{tpu_custom_call.1} parent=11 // pred_region
          _
        $region44: #{tpu_custom_call.1} parent=11 // pred_fallthru
          _
        // Predicated region
        $region45: #{tpu_custom_call.1} parent=11 // pred_check
          %p392 = pneg %p264
        $region46: #{tpu_custom_call.1} parent=11 // pred_check_branch
          %394 = sbr.rel (%p392) target = $region48
        $region47: #{tpu_custom_call.1} parent=11 // pred_region
          _
        $region48: #{tpu_custom_call.1} parent=11 // pred_fallthru
          _
        // Predicated region
        $region49: #{tpu_custom_call.1} parent=11 // pred_check
          %p395 = pneg %p285
        $region50: #{tpu_custom_call.1} parent=11 // pred_check_branch
          %397 = sbr.rel (%p395) target = $region52
        $region51: #{tpu_custom_call.1} parent=11 // pred_region
          _
        $region52: #{tpu_custom_call.1} parent=11 // pred_fallthru
          _
        // Predicated region
        $region53: #{tpu_custom_call.1} parent=11 // pred_check
          %p398 = pneg %p306
        $region54: #{tpu_custom_call.1} parent=11 // pred_check_branch
          %400 = sbr.rel (%p398) target = $region56
        $region55: #{tpu_custom_call.1} parent=11 // pred_region
          _
        $region56: #{tpu_custom_call.1} parent=11 // pred_fallthru
          _
        // Predicated region
        $region57: #{tpu_custom_call.1} parent=11 // pred_check
          %p401 = pneg %p327
        $region58: #{tpu_custom_call.1} parent=11 // pred_check_branch
          %403 = sbr.rel (%p401) target = $region60
        $region59: #{tpu_custom_call.1} parent=11 // pred_region
          _
        $region60: #{tpu_custom_call.1} parent=11 // pred_fallthru
          _
      $region12: #{tpu_custom_call.1} parent=5 // pred_fallthru
        _
      %p404 = scmp.lt.s32.totalorder %s23, 2
      // Predicated region
      $region61: #{tpu_custom_call.1} parent=5 // pred_check
        %p405 = pneg %p404
      $region62: #{tpu_custom_call.1} parent=5 // pred_check_branch
        %407 = sbr.rel (%p405) target = $region64
      $region63: #{tpu_custom_call.1} parent=5 // pred_region
        // Predicated region
        $region65: #{tpu_custom_call.1} parent=63 // pred_check
          %p408 = pneg %p43
        $region66: #{tpu_custom_call.1} parent=63 // pred_check_branch
          %410 = sbr.rel (%p408) target = $region68
        $region67: #{tpu_custom_call.1} parent=63 // pred_region
          %p411 = scmp.lt.s32.totalorder %s23, 1
          %s412 = scalar_select %p411, %s23, 1
          %s413 = scalar_lea.vmem %s0, %s412
        $region68: #{tpu_custom_call.1} parent=63 // pred_fallthru
          _
        // Predicated region
        $region69: #{tpu_custom_call.1} parent=63 // pred_check
          %p414 = pneg %p69
        $region70: #{tpu_custom_call.1} parent=63 // pred_check_branch
          %416 = sbr.rel (%p414) target = $region72
        $region71: #{tpu_custom_call.1} parent=63 // pred_region
          %p417 = scmp.lt.s32.totalorder %s23, 1
          %s418 = scalar_select %p417, %s23, 1
          %s419 = smul.addr %s418, 8
          %s420 = scalar_lea.vmem %s1, %s419
        $region72: #{tpu_custom_call.1} parent=63 // pred_fallthru
          _
      $region64: #{tpu_custom_call.1} parent=5 // pred_fallthru
        _
      %p421 = scmp.le.s32.totalorder 1, %s23
      %p422 = scmp.lt.s32.totalorder %s23, 3
      %p423 = pnand %p421, %p422
      %p424 = pneg %p423
      // Predicated region
      $region73: #{tpu_custom_call.1} parent=5 // pred_check
        _
      $region74: #{tpu_custom_call.1} parent=5 // pred_check_branch
        %426 = sbr.rel (%p423) target = $region76
      $region75: #{tpu_custom_call.1} parent=5 // pred_region
        %s427 = ssub.s32 %s23, 1
        %p428 = scmp.lt.s32.totalorder %s28, 1
        %s429 = scalar_select %p428, %s28, 1
        %s430 = scalar_lea.vmem %s0, %s429
        %p431 = pneg %p49
        %p432 = pneg %p46
        %p433 = scmp.lt.s32.totalorder %s28, 1
        %s434 = scalar_select %p433, %s28, 1
        %s435 = smul.addr %s434, 8
        %s436 = scalar_lea.vmem %s1, %s435
        %p437 = pneg %p75
        %p438 = pneg %p72
        %p439 = pneg %p96
        %p440 = pneg %p93
        %p441 = pneg %p117
        %p442 = pneg %p114
        %p443 = pneg %p138
        %p444 = pneg %p135
        %p445 = pneg %p159
        %p446 = pneg %p156
        %p447 = pneg %p180
        %p448 = pneg %p177
        %p449 = pneg %p201
        %p450 = pneg %p198
        %p451 = pneg %p222
        %p452 = pneg %p219
        %p453 = pneg %p243
        %p454 = pneg %p240
        %p455 = pneg %p264
        %p456 = pneg %p261
        %p457 = pneg %p285
        %p458 = pneg %p282
        %p459 = pneg %p306
        %p460 = pneg %p303
        %p461 = pneg %p327
        %p462 = pneg %p324
        %p463 = pneg %p353
        %p464 = pneg %p350
        %s465 = sand.u32 %s340, 1
        %s466 = scalar_lea.sflag [#allocation3], %s465
        %s467 = sand.u32 %s340, 1
        %s468 = smul.addr %s467, 8
        %s469 = scalar_lea.vmem [#allocation2], %s468
        %p470 = scmp.lt.s32.totalorder %s28, 1
        %s471 = scalar_select %p470, %s28, 1
        %s472 = scalar_lea.vmem %s0, %s471
        %p473 = scmp.lt.s32.totalorder %s28, 1
        %s474 = scalar_select %p473, %s28, 1
        %s475 = smul.addr %s474, 8
        %s476 = scalar_lea.vmem %s1, %s475
        %v477 = vld [vmem:[%s476] sm:$0xff]
        %v478 = vld [vmem:[%s2] sm:$0xff]
        %v479 = vld [vmem:[%s2 + $0x8] sm:$0xff]
        %v480 = vld [vmem:[%s2 + $0x10] sm:$0xff]
        %v481 = vld [vmem:[%s2 + $0x18] sm:$0xff]
        %v482 = vld [vmem:[%s2 + $0x20] sm:$0xff]
        %v483 = vld [vmem:[%s2 + $0x28] sm:$0xff]
        %v484 = vld [vmem:[%s2 + $0x30] sm:$0xff]
        %v485 = vld [vmem:[%s2 + $0x38] sm:$0xff]
        %v486 = vld [vmem:[%s2 + $0x40] sm:$0xff]
        %v487 = vld [vmem:[%s2 + $0x48] sm:$0xff]
        %v488 = vld [vmem:[%s2 + $0x50] sm:$0xff]
        %v489 = vld [vmem:[%s2 + $0x58] sm:$0xff]
        %v490 = vld [vmem:[%s2 + $0x60] sm:$0xff]
        %v491 = vld [vmem:[%s2 + $0x68] sm:$0xff]
        %v492 = vld [vmem:[%s2 + $0x70] sm:$0xff]
        %v493 = vld [vmem:[%s2 + $0x78] sm:$0xff]
        %v494 = vld [vmem:[%s2 + $0x80] sm:$0xff]
        %v495 = vld [vmem:[%s2 + $0x88] sm:$0xff]
        %v496 = vld [vmem:[%s2 + $0x90] sm:$0xff]
        %v497 = vld [vmem:[%s2 + $0x98] sm:$0xff]
        %v498 = vld [vmem:[%s2 + $0xa0] sm:$0xff]
        %v499 = vld [vmem:[%s2 + $0xa8] sm:$0xff]
        %v500 = vld [vmem:[%s2 + $0xb0] sm:$0xff]
        %v501 = vld [vmem:[%s2 + $0xb8] sm:$0xff]
        %v502 = vld [vmem:[%s2 + $0xc0] sm:$0xff]
        %v503 = vld [vmem:[%s2 + $0xc8] sm:$0xff]
        %v504 = vld [vmem:[%s2 + $0xd0] sm:$0xff]
        %v505 = vld [vmem:[%s2 + $0xd8] sm:$0xff]
        %v506 = vld [vmem:[%s2 + $0xe0] sm:$0xff]
        %v507 = vld [vmem:[%s2 + $0xe8] sm:$0xff]
        %v508 = vld [vmem:[%s2 + $0xf0] sm:$0xff]
        %v509 = vld [vmem:[%s2 + $0xf8] sm:$0xff]
        %v510 = vld [vmem:[%s2 + $0x100] sm:$0xff]
        %v511 = vld [vmem:[%s2 + $0x108] sm:$0xff]
        %v512 = vld [vmem:[%s2 + $0x110] sm:$0xff]
        %v513 = vld [vmem:[%s2 + $0x118] sm:$0xff]
        %v514 = vld [vmem:[%s2 + $0x120] sm:$0xff]
        %v515 = vld [vmem:[%s2 + $0x128] sm:$0xff]
        %v516 = vld [vmem:[%s2 + $0x130] sm:$0xff]
        %v517 = vld [vmem:[%s2 + $0x138] sm:$0xff]
        %v518 = vld [vmem:[%s2 + $0x140] sm:$0xff]
        %v519 = vld [vmem:[%s2 + $0x148] sm:$0xff]
        %v520 = vld [vmem:[%s2 + $0x150] sm:$0xff]
        %v521 = vld [vmem:[%s2 + $0x158] sm:$0xff]
        %v522 = vld [vmem:[%s2 + $0x160] sm:$0xff]
        %v523 = vld [vmem:[%s2 + $0x168] sm:$0xff]
        %v524 = vld [vmem:[%s2 + $0x170] sm:$0xff]
        %v525 = vld [vmem:[%s2 + $0x178] sm:$0xff]
        %v526 = vld [vmem:[%s2 + $0x180] sm:$0xff]
        %v527 = vld [vmem:[%s2 + $0x188] sm:$0xff]
        %v528 = vld [vmem:[%s2 + $0x190] sm:$0xff]
        %v529 = vld [vmem:[%s2 + $0x198] sm:$0xff]
        %v530 = vld [vmem:[%s2 + $0x1a0] sm:$0xff]
        %v531 = vld [vmem:[%s2 + $0x1a8] sm:$0xff]
        %v532 = vld [vmem:[%s2 + $0x1b0] sm:$0xff]
        %v533 = vld [vmem:[%s2 + $0x1b8] sm:$0xff]
        %v534 = vld [vmem:[%s2 + $0x1c0] sm:$0xff]
        %v535 = vld [vmem:[%s2 + $0x1c8] sm:$0xff]
        %v536 = vld [vmem:[%s2 + $0x1d0] sm:$0xff]
        %v537 = vld [vmem:[%s2 + $0x1d8] sm:$0xff]
        %v538 = vld [vmem:[%s2 + $0x1e0] sm:$0xff]
        %v539 = vld [vmem:[%s2 + $0x1e8] sm:$0xff]
        %v540 = vld [vmem:[%s2 + $0x1f0] sm:$0xff]
        %v541 = vld [vmem:[%s2 + $0x1f8] sm:$0xff]
        %v542 = vld [vmem:[%s2 + $0x200] sm:$0xff]
        %v543 = vld [vmem:[%s2 + $0x208] sm:$0xff]
        %v544 = vld [vmem:[%s2 + $0x210] sm:$0xff]
        %v545 = vld [vmem:[%s2 + $0x218] sm:$0xff]
        %v546 = vld [vmem:[%s2 + $0x220] sm:$0xff]
        %v547 = vld [vmem:[%s2 + $0x228] sm:$0xff]
        %v548 = vld [vmem:[%s2 + $0x230] sm:$0xff]
        %v549 = vld [vmem:[%s2 + $0x238] sm:$0xff]
        %v550 = vld [vmem:[%s2 + $0x240] sm:$0xff]
        %v551 = vld [vmem:[%s2 + $0x248] sm:$0xff]
        %v552 = vld [vmem:[%s2 + $0x250] sm:$0xff]
        %v553 = vld [vmem:[%s2 + $0x258] sm:$0xff]
        %v554 = vld [vmem:[%s2 + $0x260] sm:$0xff]
        %v555 = vld [vmem:[%s2 + $0x268] sm:$0xff]
        %v556 = vld [vmem:[%s2 + $0x270] sm:$0xff]
        %v557 = vld [vmem:[%s2 + $0x278] sm:$0xff]
        %v558 = vld [vmem:[%s2 + $0x280] sm:$0xff]
        %v559 = vld [vmem:[%s2 + $0x288] sm:$0xff]
        %v560 = vld [vmem:[%s2 + $0x290] sm:$0xff]
        %v561 = vld [vmem:[%s2 + $0x298] sm:$0xff]
        %v562 = vld [vmem:[%s2 + $0x2a0] sm:$0xff]
        %v563 = vld [vmem:[%s2 + $0x2a8] sm:$0xff]
        %v564 = vld [vmem:[%s2 + $0x2b0] sm:$0xff]
        %v565 = vld [vmem:[%s2 + $0x2b8] sm:$0xff]
        %v566 = vld [vmem:[%s2 + $0x2c0] sm:$0xff]
        %v567 = vld [vmem:[%s2 + $0x2c8] sm:$0xff]
        %v568 = vld [vmem:[%s2 + $0x2d0] sm:$0xff]
        %v569 = vld [vmem:[%s2 + $0x2d8] sm:$0xff]
        %v570 = vld [vmem:[%s2 + $0x2e0] sm:$0xff]
        %v571 = vld [vmem:[%s2 + $0x2e8] sm:$0xff]
        %v572 = vld [vmem:[%s2 + $0x2f0] sm:$0xff]
        %v573 = vld [vmem:[%s2 + $0x2f8] sm:$0xff]
        %v574 = vld [vmem:[%s2 + $0x300] sm:$0xff]
        %v575 = vld [vmem:[%s2 + $0x308] sm:$0xff]
        %v576 = vld [vmem:[%s2 + $0x310] sm:$0xff]
        %v577 = vld [vmem:[%s2 + $0x318] sm:$0xff]
        %v578 = vld [vmem:[%s2 + $0x320] sm:$0xff]
        %v579 = vld [vmem:[%s2 + $0x328] sm:$0xff]
        %v580 = vld [vmem:[%s2 + $0x330] sm:$0xff]
        %v581 = vld [vmem:[%s2 + $0x338] sm:$0xff]
        %v582 = vld [vmem:[%s2 + $0x340] sm:$0xff]
        %v583 = vld [vmem:[%s2 + $0x348] sm:$0xff]
        %v584 = vld [vmem:[%s2 + $0x350] sm:$0xff]
        %v585 = vld [vmem:[%s2 + $0x358] sm:$0xff]
        %v586 = vld [vmem:[%s2 + $0x360] sm:$0xff]
        %v587 = vld [vmem:[%s2 + $0x368] sm:$0xff]
        %v588 = vld [vmem:[%s2 + $0x370] sm:$0xff]
        %v589 = vld [vmem:[%s2 + $0x378] sm:$0xff]
        %v590 = vld [vmem:[%s2 + $0x380] sm:$0xff]
        %v591 = vld [vmem:[%s2 + $0x388] sm:$0xff]
        %v592 = vld [vmem:[%s2 + $0x390] sm:$0xff]
        %v593 = vld [vmem:[%s2 + $0x398] sm:$0xff]
        %v594 = vld [vmem:[%s2 + $0x3a0] sm:$0xff]
        %v595 = vld [vmem:[%s2 + $0x3a8] sm:$0xff]
        %v596 = vld [vmem:[%s2 + $0x3b0] sm:$0xff]
        %v597 = vld [vmem:[%s2 + $0x3b8] sm:$0xff]
        %v598 = vld [vmem:[%s2 + $0x3c0] sm:$0xff]
        %v599 = vld [vmem:[%s2 + $0x3c8] sm:$0xff]
        %v600 = vld [vmem:[%s2 + $0x3d0] sm:$0xff]
        %v601 = vld [vmem:[%s2 + $0x3d8] sm:$0xff]
        %v602 = vld [vmem:[%s2 + $0x3e0] sm:$0xff]
        %v603 = vld [vmem:[%s2 + $0x3e8] sm:$0xff]
        %v604 = vld [vmem:[%s2 + $0x3f0] sm:$0xff]
        %v605 = vld [vmem:[%s2 + $0x3f8] sm:$0xff]
        %v606 = vld [vmem:[%s2 + $0x400] sm:$0xff]
        %v607 = vld [vmem:[%s2 + $0x408] sm:$0xff]
        %v608 = vld [vmem:[%s2 + $0x410] sm:$0xff]
        %v609 = vld [vmem:[%s2 + $0x418] sm:$0xff]
        %v610 = vld [vmem:[%s2 + $0x420] sm:$0xff]
        %v611 = vld [vmem:[%s2 + $0x428] sm:$0xff]
        %v612 = vld [vmem:[%s2 + $0x430] sm:$0xff]
        %v613 = vld [vmem:[%s2 + $0x438] sm:$0xff]
        %v614 = vld [vmem:[%s2 + $0x440] sm:$0xff]
        %v615 = vld [vmem:[%s2 + $0x448] sm:$0xff]
        %v616 = vld [vmem:[%s2 + $0x450] sm:$0xff]
        %v617 = vld [vmem:[%s2 + $0x458] sm:$0xff]
        %v618 = vld [vmem:[%s2 + $0x460] sm:$0xff]
        %v619 = vld [vmem:[%s2 + $0x468] sm:$0xff]
        %v620 = vld [vmem:[%s2 + $0x470] sm:$0xff]
        %v621 = vld [vmem:[%s2 + $0x478] sm:$0xff]
        %v622 = vld [vmem:[%s2 + $0x480] sm:$0xff]
        %v623 = vld [vmem:[%s2 + $0x488] sm:$0xff]
        %v624 = vld [vmem:[%s2 + $0x490] sm:$0xff]
        %v625 = vld [vmem:[%s2 + $0x498] sm:$0xff]
        %v626 = vld [vmem:[%s2 + $0x4a0] sm:$0xff]
        %v627 = vld [vmem:[%s2 + $0x4a8] sm:$0xff]
        %v628 = vld [vmem:[%s2 + $0x4b0] sm:$0xff]
        %v629 = vld [vmem:[%s2 + $0x4b8] sm:$0xff]
        %v630 = vld [vmem:[%s2 + $0x4c0] sm:$0xff]
        %v631 = vld [vmem:[%s2 + $0x4c8] sm:$0xff]
        %v632 = vld [vmem:[%s2 + $0x4d0] sm:$0xff]
        %v633 = vld [vmem:[%s2 + $0x4d8] sm:$0xff]
        %v634 = vld [vmem:[%s2 + $0x4e0] sm:$0xff]
        %v635 = vld [vmem:[%s2 + $0x4e8] sm:$0xff]
        %v636 = vld [vmem:[%s2 + $0x4f0] sm:$0xff]
        %v637 = vld [vmem:[%s2 + $0x4f8] sm:$0xff]
        %v638 = vld [vmem:[%s2 + $0x500] sm:$0xff]
        %v639 = vld [vmem:[%s2 + $0x508] sm:$0xff]
        %v640 = vld [vmem:[%s2 + $0x510] sm:$0xff]
        %v641 = vld [vmem:[%s2 + $0x518] sm:$0xff]
        %v642 = vld [vmem:[%s2 + $0x520] sm:$0xff]
        %v643 = vld [vmem:[%s2 + $0x528] sm:$0xff]
        %v644 = vld [vmem:[%s2 + $0x530] sm:$0xff]
        %v645 = vld [vmem:[%s2 + $0x538] sm:$0xff]
        %v646 = vld [vmem:[%s2 + $0x540] sm:$0xff]
        %v647 = vld [vmem:[%s2 + $0x548] sm:$0xff]
        %v648 = vld [vmem:[%s2 + $0x550] sm:$0xff]
        %v649 = vld [vmem:[%s2 + $0x558] sm:$0xff]
        %v650 = vld [vmem:[%s2 + $0x560] sm:$0xff]
        %v651 = vld [vmem:[%s2 + $0x568] sm:$0xff]
        %v652 = vld [vmem:[%s2 + $0x570] sm:$0xff]
        %v653 = vld [vmem:[%s2 + $0x578] sm:$0xff]
        %v654 = vld [vmem:[%s2 + $0x580] sm:$0xff]
        %v655 = vld [vmem:[%s2 + $0x588] sm:$0xff]
        %v656 = vld [vmem:[%s2 + $0x590] sm:$0xff]
        %v657 = vld [vmem:[%s2 + $0x598] sm:$0xff]
        %v658 = vld [vmem:[%s2 + $0x5a0] sm:$0xff]
        %v659 = vld [vmem:[%s2 + $0x5a8] sm:$0xff]
        %v660 = vld [vmem:[%s2 + $0x5b0] sm:$0xff]
        %v661 = vld [vmem:[%s2 + $0x5b8] sm:$0xff]
        %v662 = vld [vmem:[%s2 + $0x5c0] sm:$0xff]
        %v663 = vld [vmem:[%s2 + $0x5c8] sm:$0xff]
        %v664 = vld [vmem:[%s2 + $0x5d0] sm:$0xff]
        %v665 = vld [vmem:[%s2 + $0x5d8] sm:$0xff]
        %v666 = vld [vmem:[%s2 + $0x5e0] sm:$0xff]
        %v667 = vld [vmem:[%s2 + $0x5e8] sm:$0xff]
        %v668 = vld [vmem:[%s2 + $0x5f0] sm:$0xff]
        %v669 = vld [vmem:[%s2 + $0x5f8] sm:$0xff]
        %v670 = vld [vmem:[%s3] sm:$0x1]
        %v671 = vld [vmem:[%s3 + $0x1] sm:$0x1]
        %v672 = vld [vmem:[%s3 + $0x2] sm:$0x1]
        %v673 = vld [vmem:[%s3 + $0x3] sm:$0x1]
        %v674 = vld [vmem:[%s3 + $0x4] sm:$0x1]
        %v675 = vld [vmem:[%s3 + $0x5] sm:$0x1]
        %v676 = vld [vmem:[%s3 + $0x6] sm:$0x1]
        %v677 = vld [vmem:[%s3 + $0x7] sm:$0x1]
        %v678 = vld [vmem:[%s3 + $0x8] sm:$0x1]
        %v679 = vld [vmem:[%s3 + $0x9] sm:$0x1]
        %v680 = vld [vmem:[%s3 + $0xa] sm:$0x1]
        %v681 = vld [vmem:[%s3 + $0xb] sm:$0x1]
        %v694 = vperm.slane %v670, 0
        %v695 = vperm.slane %v671, 0
        %v696 = vperm.slane %v672, 0
        %v697 = vperm.slane %v673, 0
        %v698 = vperm.slane %v674, 0
        %v699 = vperm.slane %v675, 0
        %v700 = vperm.slane %v676, 0
        %v701 = vperm.slane %v677, 0
        %v702 = vperm.slane %v678, 0
        %v703 = vperm.slane %v679, 0
        %v704 = vperm.slane %v680, 0
        %v705 = vperm.slane %v681, 0
        %718 = vmatpush.msra.mxu0 %v493
        %719 = vmatpush.msra.mxu0 %v492
        %720 = vmatpush.msra.mxu0 %v491
        %721 = vmatpush.msra.mxu0 %v490
        %722 = vmatpush.msra.mxu0 %v489
        %723 = vmatpush.msra.mxu0 %v488
        %724 = vmatpush.msra.mxu0 %v487
        %725 = vmatpush.msra.mxu0 %v486
        %726 = vmatpush.msra.mxu0 %v485
        %727 = vmatpush.msra.mxu0 %v484
        %728 = vmatpush.msra.mxu0 %v483
        %729 = vmatpush.msra.mxu0 %v482
        %730 = vmatpush.msra.mxu0 %v481
        %731 = vmatpush.msra.mxu0 %v480
        %732 = vmatpush.msra.mxu0 %v479
        %733 = vmatpush.msra.mxu0 %v478
        %734 = vmatmul.f32.gmra.mxu0 %v477
        %v735 = vpop.f32.mrf.mxu0
        %v736 = vadd.f32 %v694, %v735
        %737 = vdwg.mxu0
        %738 = vmatpush.msra.mxu0 %v509
        %739 = vmatpush.msra.mxu0 %v508
        %740 = vmatpush.msra.mxu0 %v507
        %741 = vmatpush.msra.mxu0 %v506
        %742 = vmatpush.msra.mxu0 %v505
        %743 = vmatpush.msra.mxu0 %v504
        %744 = vmatpush.msra.mxu0 %v503
        %745 = vmatpush.msra.mxu0 %v502
        %746 = vmatpush.msra.mxu0 %v501
        %747 = vmatpush.msra.mxu0 %v500
        %748 = vmatpush.msra.mxu0 %v499
        %749 = vmatpush.msra.mxu0 %v498
        %750 = vmatpush.msra.mxu0 %v497
        %751 = vmatpush.msra.mxu0 %v496
        %752 = vmatpush.msra.mxu0 %v495
        %753 = vmatpush.msra.mxu0 %v494
        %754 = vmatmul.f32.gmra.mxu0 %v477
        %v755 = vpop.f32.mrf.mxu0
        %v756 = vadd.f32 %v695, %v755
        %757 = vdwg.mxu0
        %758 = vmatpush.msra.mxu0 %v525
        %759 = vmatpush.msra.mxu0 %v524
        %760 = vmatpush.msra.mxu0 %v523
        %761 = vmatpush.msra.mxu0 %v522
        %762 = vmatpush.msra.mxu0 %v521
        %763 = vmatpush.msra.mxu0 %v520
        %764 = vmatpush.msra.mxu0 %v519
        %765 = vmatpush.msra.mxu0 %v518
        %766 = vmatpush.msra.mxu0 %v517
        %767 = vmatpush.msra.mxu0 %v516
        %768 = vmatpush.msra.mxu0 %v515
        %769 = vmatpush.msra.mxu0 %v514
        %770 = vmatpush.msra.mxu0 %v513
        %771 = vmatpush.msra.mxu0 %v512
        %772 = vmatpush.msra.mxu0 %v511
        %773 = vmatpush.msra.mxu0 %v510
        %774 = vmatmul.f32.gmra.mxu0 %v477
        %v775 = vpop.f32.mrf.mxu0
        %v776 = vadd.f32 %v696, %v775
        %777 = vdwg.mxu0
        %778 = vmatpush.msra.mxu0 %v541
        %779 = vmatpush.msra.mxu0 %v540
        %780 = vmatpush.msra.mxu0 %v539
        %781 = vmatpush.msra.mxu0 %v538
        %782 = vmatpush.msra.mxu0 %v537
        %783 = vmatpush.msra.mxu0 %v536
        %784 = vmatpush.msra.mxu0 %v535
        %785 = vmatpush.msra.mxu0 %v534
        %786 = vmatpush.msra.mxu0 %v533
        %787 = vmatpush.msra.mxu0 %v532
        %788 = vmatpush.msra.mxu0 %v531
        %789 = vmatpush.msra.mxu0 %v530
        %790 = vmatpush.msra.mxu0 %v529
        %791 = vmatpush.msra.mxu0 %v528
        %792 = vmatpush.msra.mxu0 %v527
        %793 = vmatpush.msra.mxu0 %v526
        %794 = vmatmul.f32.gmra.mxu0 %v477
        %v795 = vpop.f32.mrf.mxu0
        %v796 = vadd.f32 %v697, %v795
        %797 = vdwg.mxu0
        %798 = vmatpush.msra.mxu0 %v557
        %799 = vmatpush.msra.mxu0 %v556
        %800 = vmatpush.msra.mxu0 %v555
        %801 = vmatpush.msra.mxu0 %v554
        %802 = vmatpush.msra.mxu0 %v553
        %803 = vmatpush.msra.mxu0 %v552
        %804 = vmatpush.msra.mxu0 %v551
        %805 = vmatpush.msra.mxu0 %v550
        %806 = vmatpush.msra.mxu0 %v549
        %807 = vmatpush.msra.mxu0 %v548
        %808 = vmatpush.msra.mxu0 %v547
        %809 = vmatpush.msra.mxu0 %v546
        %810 = vmatpush.msra.mxu0 %v545
        %811 = vmatpush.msra.mxu0 %v544
        %812 = vmatpush.msra.mxu0 %v543
        %813 = vmatpush.msra.mxu0 %v542
        %814 = vmatmul.f32.gmra.mxu0 %v477
        %v815 = vpop.f32.mrf.mxu0
        %v816 = vadd.f32 %v698, %v815
        %817 = vdwg.mxu0
        %818 = vmatpush.msra.mxu0 %v573
        %819 = vmatpush.msra.mxu0 %v572
        %820 = vmatpush.msra.mxu0 %v571
        %821 = vmatpush.msra.mxu0 %v570
        %822 = vmatpush.msra.mxu0 %v569
        %823 = vmatpush.msra.mxu0 %v568
        %824 = vmatpush.msra.mxu0 %v567
        %825 = vmatpush.msra.mxu0 %v566
        %826 = vmatpush.msra.mxu0 %v565
        %827 = vmatpush.msra.mxu0 %v564
        %828 = vmatpush.msra.mxu0 %v563
        %829 = vmatpush.msra.mxu0 %v562
        %830 = vmatpush.msra.mxu0 %v561
        %831 = vmatpush.msra.mxu0 %v560
        %832 = vmatpush.msra.mxu0 %v559
        %833 = vmatpush.msra.mxu0 %v558
        %834 = vmatmul.f32.gmra.mxu0 %v477
        %v835 = vpop.f32.mrf.mxu0
        %v836 = vadd.f32 %v699, %v835
        %837 = vdwg.mxu0
        %838 = vmatpush.msra.mxu0 %v589
        %839 = vmatpush.msra.mxu0 %v588
        %840 = vmatpush.msra.mxu0 %v587
        %841 = vmatpush.msra.mxu0 %v586
        %842 = vmatpush.msra.mxu0 %v585
        %843 = vmatpush.msra.mxu0 %v584
        %844 = vmatpush.msra.mxu0 %v583
        %845 = vmatpush.msra.mxu0 %v582
        %846 = vmatpush.msra.mxu0 %v581
        %847 = vmatpush.msra.mxu0 %v580
        %848 = vmatpush.msra.mxu0 %v579
        %849 = vmatpush.msra.mxu0 %v578
        %850 = vmatpush.msra.mxu0 %v577
        %851 = vmatpush.msra.mxu0 %v576
        %852 = vmatpush.msra.mxu0 %v575
        %853 = vmatpush.msra.mxu0 %v574
        %854 = vmatmul.f32.gmra.mxu0 %v477
        %v855 = vpop.f32.mrf.mxu0
        %v856 = vadd.f32 %v700, %v855
        %857 = vdwg.mxu0
        %858 = vmatpush.msra.mxu0 %v605
        %859 = vmatpush.msra.mxu0 %v604
        %860 = vmatpush.msra.mxu0 %v603
        %861 = vmatpush.msra.mxu0 %v602
        %862 = vmatpush.msra.mxu0 %v601
        %863 = vmatpush.msra.mxu0 %v600
        %864 = vmatpush.msra.mxu0 %v599
        %865 = vmatpush.msra.mxu0 %v598
        %866 = vmatpush.msra.mxu0 %v597
        %867 = vmatpush.msra.mxu0 %v596
        %868 = vmatpush.msra.mxu0 %v595
        %869 = vmatpush.msra.mxu0 %v594
        %870 = vmatpush.msra.mxu0 %v593
        %871 = vmatpush.msra.mxu0 %v592
        %872 = vmatpush.msra.mxu0 %v591
        %873 = vmatpush.msra.mxu0 %v590
        %874 = vmatmul.f32.gmra.mxu0 %v477
        %v875 = vpop.f32.mrf.mxu0
        %v876 = vadd.f32 %v701, %v875
        %877 = vdwg.mxu0
        %878 = vmatpush.msra.mxu0 %v621
        %879 = vmatpush.msra.mxu0 %v620
        %880 = vmatpush.msra.mxu0 %v619
        %881 = vmatpush.msra.mxu0 %v618
        %882 = vmatpush.msra.mxu0 %v617
        %883 = vmatpush.msra.mxu0 %v616
        %884 = vmatpush.msra.mxu0 %v615
        %885 = vmatpush.msra.mxu0 %v614
        %886 = vmatpush.msra.mxu0 %v613
        %887 = vmatpush.msra.mxu0 %v612
        %888 = vmatpush.msra.mxu0 %v611
        %889 = vmatpush.msra.mxu0 %v610
        %890 = vmatpush.msra.mxu0 %v609
        %891 = vmatpush.msra.mxu0 %v608
        %892 = vmatpush.msra.mxu0 %v607
        %893 = vmatpush.msra.mxu0 %v606
        %894 = vmatmul.f32.gmra.mxu0 %v477
        %v895 = vpop.f32.mrf.mxu0
        %v896 = vadd.f32 %v702, %v895
        %897 = vdwg.mxu0
        %898 = vmatpush.msra.mxu0 %v637
        %899 = vmatpush.msra.mxu0 %v636
        %900 = vmatpush.msra.mxu0 %v635
        %901 = vmatpush.msra.mxu0 %v634
        %902 = vmatpush.msra.mxu0 %v633
        %903 = vmatpush.msra.mxu0 %v632
        %904 = vmatpush.msra.mxu0 %v631
        %905 = vmatpush.msra.mxu0 %v630
        %906 = vmatpush.msra.mxu0 %v629
        %907 = vmatpush.msra.mxu0 %v628
        %908 = vmatpush.msra.mxu0 %v627
        %909 = vmatpush.msra.mxu0 %v626
        %910 = vmatpush.msra.mxu0 %v625
        %911 = vmatpush.msra.mxu0 %v624
        %912 = vmatpush.msra.mxu0 %v623
        %913 = vmatpush.msra.mxu0 %v622
        %914 = vmatmul.f32.gmra.mxu0 %v477
        %v915 = vpop.f32.mrf.mxu0
        %v916 = vadd.f32 %v703, %v915
        %917 = vdwg.mxu0
        %918 = vmatpush.msra.mxu0 %v653
        %919 = vmatpush.msra.mxu0 %v652
        %920 = vmatpush.msra.mxu0 %v651
        %921 = vmatpush.msra.mxu0 %v650
        %922 = vmatpush.msra.mxu0 %v649
        %923 = vmatpush.msra.mxu0 %v648
        %924 = vmatpush.msra.mxu0 %v647
        %925 = vmatpush.msra.mxu0 %v646
        %926 = vmatpush.msra.mxu0 %v645
        %927 = vmatpush.msra.mxu0 %v644
        %928 = vmatpush.msra.mxu0 %v643
        %929 = vmatpush.msra.mxu0 %v642
        %930 = vmatpush.msra.mxu0 %v641
        %931 = vmatpush.msra.mxu0 %v640
        %932 = vmatpush.msra.mxu0 %v639
        %933 = vmatpush.msra.mxu0 %v638
        %934 = vmatmul.f32.gmra.mxu0 %v477
        %v935 = vpop.f32.mrf.mxu0
        %v936 = vadd.f32 %v704, %v935
        %937 = vdwg.mxu0
        %938 = vmatpush.msra.mxu0 %v669
        %939 = vmatpush.msra.mxu0 %v668
        %940 = vmatpush.msra.mxu0 %v667
        %941 = vmatpush.msra.mxu0 %v666
        %942 = vmatpush.msra.mxu0 %v665
        %943 = vmatpush.msra.mxu0 %v664
        %944 = vmatpush.msra.mxu0 %v663
        %945 = vmatpush.msra.mxu0 %v662
        %946 = vmatpush.msra.mxu0 %v661
        %947 = vmatpush.msra.mxu0 %v660
        %948 = vmatpush.msra.mxu0 %v659
        %949 = vmatpush.msra.mxu0 %v658
        %950 = vmatpush.msra.mxu0 %v657
        %951 = vmatpush.msra.mxu0 %v656
        %952 = vmatpush.msra.mxu0 %v655
        %953 = vmatpush.msra.mxu0 %v654
        %954 = vmatmul.f32.gmra.mxu0 %v477
        %v955 = vpop.f32.mrf.mxu0
        %v956 = vadd.f32 %v705, %v955
        %957 = vdwg.mxu0
        %v958 = vld [vmem:[%s472] sm:$0x1]
        %vm959 = vcmp.eq.f32.partialorder %v958, 0.0
        %v960 = vsel %vm959, -1e+30, 0.0
        %vm961 = vcmask 261120
        %v963 = vsel %vm961, %v736, 0
        %v966 = vsel %vm961, %v816, 0
        %968 = vmatpush.xpose.msra.mxu0 0.0
        %969 = vmatpush.xpose.msra.mxu0 0.0
        %970 = vmatpush.xpose.msra.mxu0 0.0
        %971 = vmatpush.xpose.msra.mxu0 0.0
        %972 = vmatpush.xpose.msra.mxu0 0.0
        %973 = vmatpush.xpose.msra.mxu0 0.0
        %974 = vmatpush.xpose.msra.mxu0 0.0
        %975 = vmatpush.xpose.msra.mxu0 0.0
        %976 = vmatpush.xpose.msra.mxu0 0.0
        %977 = vmatpush.xpose.msra.mxu0 0.0
        %978 = vmatpush.xpose.msra.mxu0 0.0
        %979 = vmatpush.xpose.msra.mxu0 0.0
        %980 = vmatpush.xpose.msra.mxu0 0.0
        %981 = vmatpush.xpose.msra.mxu0 0.0
        %982 = vmatpush.xpose.msra.mxu0 0.0
        %983 = vmatpush.xpose.msra.mxu0 %v966
        %984 = vmatmul.f32.gmra.mxu0 %v963
        %v985 = vpop.f32.mrf.mxu0
        %v986 = vadd.f32 0.0, %v985
        %987 = vdwg.mxu0
        %v989 = vsel %vm961, %v756, 0
        %v992 = vsel %vm961, %v836, 0
        %994 = vmatpush.xpose.msra.mxu0 0.0
        %995 = vmatpush.xpose.msra.mxu0 0.0
        %996 = vmatpush.xpose.msra.mxu0 0.0
        %997 = vmatpush.xpose.msra.mxu0 0.0
        %998 = vmatpush.xpose.msra.mxu0 0.0
        %999 = vmatpush.xpose.msra.mxu0 0.0
        %1000 = vmatpush.xpose.msra.mxu0 0.0
        %1001 = vmatpush.xpose.msra.mxu0 0.0
        %1002 = vmatpush.xpose.msra.mxu0 0.0
        %1003 = vmatpush.xpose.msra.mxu0 0.0
        %1004 = vmatpush.xpose.msra.mxu0 0.0
        %1005 = vmatpush.xpose.msra.mxu0 0.0
        %1006 = vmatpush.xpose.msra.mxu0 0.0
        %1007 = vmatpush.xpose.msra.mxu0 0.0
        %1008 = vmatpush.xpose.msra.mxu0 0.0
        %1009 = vmatpush.xpose.msra.mxu0 %v992
        %1010 = vmatmul.f32.gmra.mxu0 %v989
        %v1011 = vpop.f32.mrf.mxu0
        %v1012 = vadd.f32 0.0, %v1011
        %1013 = vdwg.mxu0
        %v1015 = vsel %vm961, %v776, 0
        %v1018 = vsel %vm961, %v856, 0
        %1020 = vmatpush.xpose.msra.mxu0 0.0
        %1021 = vmatpush.xpose.msra.mxu0 0.0
        %1022 = vmatpush.xpose.msra.mxu0 0.0
        %1023 = vmatpush.xpose.msra.mxu0 0.0
        %1024 = vmatpush.xpose.msra.mxu0 0.0
        %1025 = vmatpush.xpose.msra.mxu0 0.0
        %1026 = vmatpush.xpose.msra.mxu0 0.0
        %1027 = vmatpush.xpose.msra.mxu0 0.0
        %1028 = vmatpush.xpose.msra.mxu0 0.0
        %1029 = vmatpush.xpose.msra.mxu0 0.0
        %1030 = vmatpush.xpose.msra.mxu0 0.0
        %1031 = vmatpush.xpose.msra.mxu0 0.0
        %1032 = vmatpush.xpose.msra.mxu0 0.0
        %1033 = vmatpush.xpose.msra.mxu0 0.0
        %1034 = vmatpush.xpose.msra.mxu0 0.0
        %1035 = vmatpush.xpose.msra.mxu0 %v1018
        %1036 = vmatmul.f32.gmra.mxu0 %v1015
        %v1037 = vpop.f32.mrf.mxu0
        %v1038 = vadd.f32 0.0, %v1037
        %1039 = vdwg.mxu0
        %v1041 = vsel %vm961, %v796, 0
        %v1044 = vsel %vm961, %v876, 0
        %1046 = vmatpush.xpose.msra.mxu0 0.0
        %1047 = vmatpush.xpose.msra.mxu0 0.0
        %1048 = vmatpush.xpose.msra.mxu0 0.0
        %1049 = vmatpush.xpose.msra.mxu0 0.0
        %1050 = vmatpush.xpose.msra.mxu0 0.0
        %1051 = vmatpush.xpose.msra.mxu0 0.0
        %1052 = vmatpush.xpose.msra.mxu0 0.0
        %1053 = vmatpush.xpose.msra.mxu0 0.0
        %1054 = vmatpush.xpose.msra.mxu0 0.0
        %1055 = vmatpush.xpose.msra.mxu0 0.0
        %1056 = vmatpush.xpose.msra.mxu0 0.0
        %1057 = vmatpush.xpose.msra.mxu0 0.0
        %1058 = vmatpush.xpose.msra.mxu0 0.0
        %1059 = vmatpush.xpose.msra.mxu0 0.0
        %1060 = vmatpush.xpose.msra.mxu0 0.0
        %1061 = vmatpush.xpose.msra.mxu0 %v1044
        %1062 = vmatmul.f32.gmra.mxu0 %v1041
        %v1063 = vpop.f32.mrf.mxu0
        %v1064 = vadd.f32 0.0, %v1063
        %1065 = vdwg.mxu0
        %v1066 = vmul.f32 %v986, 0.17677669
        %v1067 = vmul.f32 %v1012, 0.17677669
        %v1068 = vmul.f32 %v1038, 0.17677669
        %v1069 = vmul.f32 %v1064, 0.17677669
        %v1071 = vperm.slane %v960, 0
        %v1073 = vadd.f32 %v1066, %v1071
        %v1074 = vadd.f32 %v1067, %v1071
        %v1075 = vadd.f32 %v1068, %v1071
        %v1076 = vadd.f32 %v1069, %v1071
        %vm1077 = vcmask 64512
        %v1078 = vsel %vm1077, %v1073, -inf
        %1079 = vmax.xlane.f32.xlu0 %v1078
        %v1080 = vpop.xlane.xlu0 %1079
        %v1081 = vsel %vm1077, %v1074, -inf
        %1082 = vmax.xlane.f32.xlu0 %v1081
        %v1083 = vpop.xlane.xlu0 %1082
        %v1084 = vsel %vm1077, %v1075, -inf
        %1085 = vmax.xlane.f32.xlu0 %v1084
        %v1086 = vpop.xlane.xlu0 %1085
        %v1087 = vsel %vm1077, %v1076, -inf
        %1088 = vmax.xlane.f32.xlu0 %v1087
        %v1089 = vpop.xlane.xlu0 %1088
        %v1090 = vsub.f32 %v1073, %v1080
        %v1091 = vsub.f32 %v1074, %v1083
        %v1092 = vsub.f32 %v1075, %v1086
        %v1093 = vsub.f32 %v1076, %v1089
        %v1094 = vmul.f32 %v1090, 1.442695
        %v1095 = vpow.pop %v1094
        %v1096 = vmul.f32 %v1091, 1.442695
        %v1097 = vpow.pop %v1096
        %v1098 = vmul.f32 %v1092, 1.442695
        %v1099 = vpow.pop %v1098
        %v1100 = vmul.f32 %v1093, 1.442695
        %v1101 = vpow.pop %v1100
        %v1102 = vsel %vm1077, %v1095, 0.0
        %1103 = vadd.xlane.f32.xlu0 %v1102
        %v1104 = vpop.xlane.xlu0 %1103
        %v1105 = vsel %vm1077, %v1097, 0.0
        %1106 = vadd.xlane.f32.xlu0 %v1105
        %v1107 = vpop.xlane.xlu0 %1106
        %v1108 = vsel %vm1077, %v1099, 0.0
        %1109 = vadd.xlane.f32.xlu0 %v1108
        %v1110 = vpop.xlane.xlu0 %1109
        %v1111 = vsel %vm1077, %v1101, 0.0
        %1112 = vadd.xlane.f32.xlu0 %v1111
        %v1113 = vpop.xlane.xlu0 %1112
        %v1114 = vrcp.pop %v1104
        %v1115 = vrcp.pop %v1107
        %v1116 = vrcp.pop %v1110
        %v1117 = vrcp.pop %v1113
        %v1118 = vmul.f32 %v1095, %v1114
        %v1119 = vmul.f32 %v1097, %v1115
        %v1120 = vmul.f32 %v1099, %v1116
        %v1121 = vmul.f32 %v1101, %v1117
        %v1123 = vsel %vm1077, %v1118, 0
        %1125 = vmatpush.msra.mxu0 0.0
        %1126 = vmatpush.msra.mxu0 0.0
        %1127 = vmatpush.msra.mxu0 0.0
        %1128 = vmatpush.msra.mxu0 0.0
        %1129 = vmatpush.msra.mxu0 0.0
        %1130 = vmatpush.msra.mxu0 0.0
        %1131 = vmatpush.msra.mxu0 0.0
        %1132 = vmatpush.msra.mxu0 0.0
        %1133 = vmatpush.msra.mxu0 0.0
        %1134 = vmatpush.msra.mxu0 0.0
        %1135 = vmatpush.msra.mxu0 0.0
        %1136 = vmatpush.msra.mxu0 0.0
        %1137 = vmatpush.msra.mxu0 0.0
        %1138 = vmatpush.msra.mxu0 0.0
        %1139 = vmatpush.msra.mxu0 0.0
        %1140 = vmatpush.msra.mxu0 %v896
        %1141 = vmatmul.f32.gmra.mxu0 %v1123
        %v1142 = vpop.f32.mrf.mxu0
        %v1143 = vadd.f32 0.0, %v1142
        %1144 = vdwg.mxu0
        %v1146 = vsel %vm1077, %v1119, 0
        %1148 = vmatpush.msra.mxu0 0.0
        %1149 = vmatpush.msra.mxu0 0.0
        %1150 = vmatpush.msra.mxu0 0.0
        %1151 = vmatpush.msra.mxu0 0.0
        %1152 = vmatpush.msra.mxu0 0.0
        %1153 = vmatpush.msra.mxu0 0.0
        %1154 = vmatpush.msra.mxu0 0.0
        %1155 = vmatpush.msra.mxu0 0.0
        %1156 = vmatpush.msra.mxu0 0.0
        %1157 = vmatpush.msra.mxu0 0.0
        %1158 = vmatpush.msra.mxu0 0.0
        %1159 = vmatpush.msra.mxu0 0.0
        %1160 = vmatpush.msra.mxu0 0.0
        %1161 = vmatpush.msra.mxu0 0.0
        %1162 = vmatpush.msra.mxu0 0.0
        %1163 = vmatpush.msra.mxu0 %v916
        %1164 = vmatmul.f32.gmra.mxu0 %v1146
        %v1165 = vpop.f32.mrf.mxu0
        %v1166 = vadd.f32 0.0, %v1165
        %1167 = vdwg.mxu0
        %v1169 = vsel %vm1077, %v1120, 0
        %1171 = vmatpush.msra.mxu0 0.0
        %1172 = vmatpush.msra.mxu0 0.0
        %1173 = vmatpush.msra.mxu0 0.0
        %1174 = vmatpush.msra.mxu0 0.0
        %1175 = vmatpush.msra.mxu0 0.0
        %1176 = vmatpush.msra.mxu0 0.0
        %1177 = vmatpush.msra.mxu0 0.0
        %1178 = vmatpush.msra.mxu0 0.0
        %1179 = vmatpush.msra.mxu0 0.0
        %1180 = vmatpush.msra.mxu0 0.0
        %1181 = vmatpush.msra.mxu0 0.0
        %1182 = vmatpush.msra.mxu0 0.0
        %1183 = vmatpush.msra.mxu0 0.0
        %1184 = vmatpush.msra.mxu0 0.0
        %1185 = vmatpush.msra.mxu0 0.0
        %1186 = vmatpush.msra.mxu0 %v936
        %1187 = vmatmul.f32.gmra.mxu0 %v1169
        %v1188 = vpop.f32.mrf.mxu0
        %v1189 = vadd.f32 0.0, %v1188
        %1190 = vdwg.mxu0
        %v1192 = vsel %vm1077, %v1121, 0
        %1194 = vmatpush.msra.mxu0 0.0
        %1195 = vmatpush.msra.mxu0 0.0
        %1196 = vmatpush.msra.mxu0 0.0
        %1197 = vmatpush.msra.mxu0 0.0
        %1198 = vmatpush.msra.mxu0 0.0
        %1199 = vmatpush.msra.mxu0 0.0
        %1200 = vmatpush.msra.mxu0 0.0
        %1201 = vmatpush.msra.mxu0 0.0
        %1202 = vmatpush.msra.mxu0 0.0
        %1203 = vmatpush.msra.mxu0 0.0
        %1204 = vmatpush.msra.mxu0 0.0
        %1205 = vmatpush.msra.mxu0 0.0
        %1206 = vmatpush.msra.mxu0 0.0
        %1207 = vmatpush.msra.mxu0 0.0
        %1208 = vmatpush.msra.mxu0 0.0
        %1209 = vmatpush.msra.mxu0 %v956
        %1210 = vmatmul.f32.gmra.mxu0 %v1192
        %v1211 = vpop.f32.mrf.mxu0
        %v1212 = vadd.f32 0.0, %v1211
        %1213 = vdwg.mxu0
        %1215 = vrot.lane.b32.xlu0 %v1166, 32
        %v1216 = vpop.permute.xlu0 %1215
        %1219 = vrot.lane.b32.xlu0 %v1189, 64
        %v1220 = vpop.permute.xlu0 %1219
        %1223 = vrot.lane.b32.xlu0 %v1212, 96
        %v1224 = vpop.permute.xlu0 %1223
        %v1226 = vsel %vm961, %v1143, %v1216
        %vm1227 = vcmask 523264
        %v1228 = vsel %vm1227, %v1226, %v1220
        %vm1229 = vcmask 785408
        %v1230 = vsel %vm1229, %v1228, %v1224
        %v1231 = vld [vmem:[%s4] sm:$0xff]
        %v1232 = vld [vmem:[%s4 + $0x8] sm:$0xff]
        %v1233 = vld [vmem:[%s4 + $0x10] sm:$0xff]
        %v1234 = vld [vmem:[%s4 + $0x18] sm:$0xff]
        %v1235 = vld [vmem:[%s4 + $0x20] sm:$0xff]
        %v1236 = vld [vmem:[%s4 + $0x28] sm:$0xff]
        %v1237 = vld [vmem:[%s4 + $0x30] sm:$0xff]
        %v1238 = vld [vmem:[%s4 + $0x38] sm:$0xff]
        %v1239 = vld [vmem:[%s4 + $0x40] sm:$0xff]
        %v1240 = vld [vmem:[%s4 + $0x48] sm:$0xff]
        %v1241 = vld [vmem:[%s4 + $0x50] sm:$0xff]
        %v1242 = vld [vmem:[%s4 + $0x58] sm:$0xff]
        %v1243 = vld [vmem:[%s4 + $0x60] sm:$0xff]
        %v1244 = vld [vmem:[%s4 + $0x68] sm:$0xff]
        %v1245 = vld [vmem:[%s4 + $0x70] sm:$0xff]
        %v1246 = vld [vmem:[%s4 + $0x78] sm:$0xff]
        %v1247 = vld [vmem:[%s5] sm:$0x1]
        %v1249 = vperm.slane %v1247, 0
        %1251 = vmatpush.msra.mxu0 %v1246
        %1252 = vmatpush.msra.mxu0 %v1245
        %1253 = vmatpush.msra.mxu0 %v1244
        %1254 = vmatpush.msra.mxu0 %v1243
        %1255 = vmatpush.msra.mxu0 %v1242
        %1256 = vmatpush.msra.mxu0 %v1241
        %1257 = vmatpush.msra.mxu0 %v1240
        %1258 = vmatpush.msra.mxu0 %v1239
        %1259 = vmatpush.msra.mxu0 %v1238
        %1260 = vmatpush.msra.mxu0 %v1237
        %1261 = vmatpush.msra.mxu0 %v1236
        %1262 = vmatpush.msra.mxu0 %v1235
        %1263 = vmatpush.msra.mxu0 %v1234
        %1264 = vmatpush.msra.mxu0 %v1233
        %1265 = vmatpush.msra.mxu0 %v1232
        %1266 = vmatpush.msra.mxu0 %v1231
        %1267 = vmatmul.f32.gmra.mxu0 %v1230
        %v1268 = vpop.f32.mrf.mxu0
        %v1269 = vadd.f32 %v1249, %v1268
        %1270 = vdwg.mxu0
        %v1271 = vld [vmem:[%s12] sm:$0x1]
        %v1272 = vld [vmem:[%s13] sm:$0x1]
        %v1273 = vadd.f32 %v1269, %v477
        %1274 = vadd.xlane.f32.xlu0 %v1273
        %v1275 = vpop.xlane.xlu0 %1274
        %v1276 = vrcp.pop 128.0
        %v1277 = vmul.f32 128.0, %v1276
        %v1278 = vsub.f32 1.0, %v1277
        %v1279 = vmul.f32 %v1276, %v1278
        %v1280 = vadd.f32 %v1276, %v1279
        %vm1281 = vweird.f32 %v1276
        %v1282 = vsel %vm1281, %v1276, %v1280
        %v1283 = vmul.f32 %v1275, %v1282
        %v1284 = vsub.f32 %v1273, %v1283
        %v1285 = vmul.f32 %v1284, %v1284
        %1286 = vadd.xlane.f32.xlu0 %v1285
        %v1287 = vpop.xlane.xlu0 %1286
        %v1288 = vmul.f32 %v1287, %v1282
        %v1289 = vadd.f32 %v1288, 1e-05
        %v1290 = vrsqrt.pop %v1289
        %v1291 = vmul.f32 %v1290, %v1289
        %v1292 = vmul.f32 %v1291, %v1290
        %v1293 = vmul.f32 0.5, %v1292
        %v1294 = vsub.f32 1.5, %v1293
        %v1295 = vmul.f32 %v1290, %v1294
        %vm1296 = vweird.f32 %v1289
        %vm1297 = vweird.f32 %v1290
        %vm1298 = vmor %vm1296, %vm1297
        %v1299 = vsel %vm1298, %v1290, %v1295
        %v1300 = vmul.f32 %v1284, %v1299
        %v1302 = vperm.slane %v1271, 0
        %v1304 = vmul.f32 %v1300, %v1302
        %v1306 = vperm.slane %v1272, 0
        %v1308 = vadd.f32 %v1304, %v1306
        %v1309 = vld [vmem:[%s6] sm:$0xff]
        %v1310 = vld [vmem:[%s6 + $0x8] sm:$0xff]
        %v1311 = vld [vmem:[%s6 + $0x10] sm:$0xff]
        %v1312 = vld [vmem:[%s6 + $0x18] sm:$0xff]
        %v1313 = vld [vmem:[%s6 + $0x20] sm:$0xff]
        %v1314 = vld [vmem:[%s6 + $0x28] sm:$0xff]
        %v1315 = vld [vmem:[%s6 + $0x30] sm:$0xff]
        %v1316 = vld [vmem:[%s6 + $0x38] sm:$0xff]
        %v1317 = vld [vmem:[%s6 + $0x40] sm:$0xff]
        %v1318 = vld [vmem:[%s6 + $0x48] sm:$0xff]
        %v1319 = vld [vmem:[%s6 + $0x50] sm:$0xff]
        %v1320 = vld [vmem:[%s6 + $0x58] sm:$0xff]
        %v1321 = vld [vmem:[%s6 + $0x60] sm:$0xff]
        %v1322 = vld [vmem:[%s6 + $0x68] sm:$0xff]
        %v1323 = vld [vmem:[%s6 + $0x70] sm:$0xff]
        %v1324 = vld [vmem:[%s6 + $0x78] sm:$0xff]
        %v1325 = vld [vmem:[%s7] sm:$0x1]
        %v1327 = vperm.slane %v1325, 0
        %1329 = vmatpush.msra.mxu0 %v1324
        %1330 = vmatpush.msra.mxu0 %v1323
        %1331 = vmatpush.msra.mxu0 %v1322
        %1332 = vmatpush.msra.mxu0 %v1321
        %1333 = vmatpush.msra.mxu0 %v1320
        %1334 = vmatpush.msra.mxu0 %v1319
        %1335 = vmatpush.msra.mxu0 %v1318
        %1336 = vmatpush.msra.mxu0 %v1317
        %1337 = vmatpush.msra.mxu0 %v1316
        %1338 = vmatpush.msra.mxu0 %v1315
        %1339 = vmatpush.msra.mxu0 %v1314
        %1340 = vmatpush.msra.mxu0 %v1313
        %1341 = vmatpush.msra.mxu0 %v1312
        %1342 = vmatpush.msra.mxu0 %v1311
        %1343 = vmatpush.msra.mxu0 %v1310
        %1344 = vmatpush.msra.mxu0 %v1309
        %1345 = vmatmul.f32.gmra.mxu0 %v1308
        %v1346 = vpop.f32.mrf.mxu0
        %v1347 = vadd.f32 %v1327, %v1346
        %1348 = vdwg.mxu0
        %v1349 = vmax.f32 %v1347, 0.0
        %v1350 = vld [vmem:[%s8] sm:$0xff]
        %v1351 = vld [vmem:[%s8 + $0x8] sm:$0xff]
        %v1352 = vld [vmem:[%s8 + $0x10] sm:$0xff]
        %v1353 = vld [vmem:[%s8 + $0x18] sm:$0xff]
        %v1354 = vld [vmem:[%s8 + $0x20] sm:$0xff]
        %v1355 = vld [vmem:[%s8 + $0x28] sm:$0xff]
        %v1356 = vld [vmem:[%s8 + $0x30] sm:$0xff]
        %v1357 = vld [vmem:[%s8 + $0x38] sm:$0xff]
        %v1358 = vld [vmem:[%s8 + $0x40] sm:$0xff]
        %v1359 = vld [vmem:[%s8 + $0x48] sm:$0xff]
        %v1360 = vld [vmem:[%s8 + $0x50] sm:$0xff]
        %v1361 = vld [vmem:[%s8 + $0x58] sm:$0xff]
        %v1362 = vld [vmem:[%s8 + $0x60] sm:$0xff]
        %v1363 = vld [vmem:[%s8 + $0x68] sm:$0xff]
        %v1364 = vld [vmem:[%s8 + $0x70] sm:$0xff]
        %v1365 = vld [vmem:[%s8 + $0x78] sm:$0xff]
        %v1366 = vld [vmem:[%s9] sm:$0x1]
        %v1368 = vperm.slane %v1366, 0
        %1370 = vmatpush.msra.mxu0 %v1365
        %1371 = vmatpush.msra.mxu0 %v1364
        %1372 = vmatpush.msra.mxu0 %v1363
        %1373 = vmatpush.msra.mxu0 %v1362
        %1374 = vmatpush.msra.mxu0 %v1361
        %1375 = vmatpush.msra.mxu0 %v1360
        %1376 = vmatpush.msra.mxu0 %v1359
        %1377 = vmatpush.msra.mxu0 %v1358
        %1378 = vmatpush.msra.mxu0 %v1357
        %1379 = vmatpush.msra.mxu0 %v1356
        %1380 = vmatpush.msra.mxu0 %v1355
        %1381 = vmatpush.msra.mxu0 %v1354
        %1382 = vmatpush.msra.mxu0 %v1353
        %1383 = vmatpush.msra.mxu0 %v1352
        %1384 = vmatpush.msra.mxu0 %v1351
        %1385 = vmatpush.msra.mxu0 %v1350
        %1386 = vmatmul.f32.gmra.mxu0 %v1349
        %v1387 = vpop.f32.mrf.mxu0
        %v1388 = vadd.f32 %v1368, %v1387
        %1389 = vdwg.mxu0
        %v1390 = vmax.f32 %v1388, 0.0
        %v1391 = vld [vmem:[%s10] sm:$0xff]
        %v1392 = vld [vmem:[%s10 + $0x8] sm:$0xff]
        %v1393 = vld [vmem:[%s10 + $0x10] sm:$0xff]
        %v1394 = vld [vmem:[%s10 + $0x18] sm:$0xff]
        %v1395 = vld [vmem:[%s10 + $0x20] sm:$0xff]
        %v1396 = vld [vmem:[%s10 + $0x28] sm:$0xff]
        %v1397 = vld [vmem:[%s10 + $0x30] sm:$0xff]
        %v1398 = vld [vmem:[%s10 + $0x38] sm:$0xff]
        %v1399 = vld [vmem:[%s10 + $0x40] sm:$0xff]
        %v1400 = vld [vmem:[%s10 + $0x48] sm:$0xff]
        %v1401 = vld [vmem:[%s10 + $0x50] sm:$0xff]
        %v1402 = vld [vmem:[%s10 + $0x58] sm:$0xff]
        %v1403 = vld [vmem:[%s10 + $0x60] sm:$0xff]
        %v1404 = vld [vmem:[%s10 + $0x68] sm:$0xff]
        %v1405 = vld [vmem:[%s10 + $0x70] sm:$0xff]
        %v1406 = vld [vmem:[%s10 + $0x78] sm:$0xff]
        %v1407 = vld [vmem:[%s11] sm:$0x1]
        %v1409 = vperm.slane %v1407, 0
        %1411 = vmatpush.msra.mxu0 %v1406
        %1412 = vmatpush.msra.mxu0 %v1405
        %1413 = vmatpush.msra.mxu0 %v1404
        %1414 = vmatpush.msra.mxu0 %v1403
        %1415 = vmatpush.msra.mxu0 %v1402
        %1416 = vmatpush.msra.mxu0 %v1401
        %1417 = vmatpush.msra.mxu0 %v1400
        %1418 = vmatpush.msra.mxu0 %v1399
        %1419 = vmatpush.msra.mxu0 %v1398
        %1420 = vmatpush.msra.mxu0 %v1397
        %1421 = vmatpush.msra.mxu0 %v1396
        %1422 = vmatpush.msra.mxu0 %v1395
        %1423 = vmatpush.msra.mxu0 %v1394
        %1424 = vmatpush.msra.mxu0 %v1393
        %1425 = vmatpush.msra.mxu0 %v1392
        %1426 = vmatpush.msra.mxu0 %v1391
        %1427 = vmatmul.f32.gmra.mxu0 %v1390
        %v1428 = vpop.f32.mrf.mxu0
        %v1429 = vadd.f32 %v1409, %v1428
        %1430 = vdwg.mxu0
        %v1431 = vadd.f32 %v1429, %v1308
        %1432 = vadd.xlane.f32.xlu0 %v1431
        %v1433 = vpop.xlane.xlu0 %1432
        %v1434 = vmul.f32 %v1433, %v1282
        %v1435 = vsub.f32 %v1431, %v1434
        %v1436 = vmul.f32 %v1435, %v1435
        %1437 = vadd.xlane.f32.xlu0 %v1436
        %v1438 = vpop.xlane.xlu0 %1437
        %v1439 = vmul.f32 %v1438, %v1282
        %v1440 = vadd.f32 %v1439, 1e-05
        %v1441 = vrsqrt.pop %v1440
        %v1442 = vmul.f32 %v1441, %v1440
        %v1443 = vmul.f32 %v1442, %v1441
        %v1444 = vmul.f32 0.5, %v1443
        %v1445 = vsub.f32 1.5, %v1444
        %v1446 = vmul.f32 %v1441, %v1445
        %vm1447 = vweird.f32 %v1440
        %vm1448 = vweird.f32 %v1441
        %vm1449 = vmor %vm1447, %vm1448
        %v1450 = vsel %vm1449, %v1441, %v1446
        %v1451 = vmul.f32 %v1435, %v1450
        %v1452 = vmul.f32 %v1451, %v1302
        %v1453 = vadd.f32 %v1452, %v1306
        %1454 = vst [vmem:[%s469] sm:$0xff] %v1453
        %s1455 = sand.u32 %s340, 1
        %s1456 = scalar_lea.sflag [#allocation3], %s1455
        %s1457 = sand.u32 %s340, 1
        %s1458 = smul.addr %s1457, 8
        %s1459 = scalar_lea.vmem [#allocation2], %s1458
        // Predicated region
        $region77: #{tpu_custom_call.1} parent=75 // pred_check
          %p1460 = pneg %p350
        $region78: #{tpu_custom_call.1} parent=75 // pred_check_branch
          %1462 = sbr.rel (%p1460) target = $region80
        $region79: #{tpu_custom_call.1} parent=75 // pred_region
          %1464 = vsyncadd %s1456, 0
          %s1465 = smul.addr %s28, 8
          %s1466 = scalar_lea.hbm %s14, %s1465
          %s1468 = sshll.u32 %s1459, 4
          %s1469 = int_to_ptr.vmem [resolvable:$true] %s1468
          %s1470 = sshll.u32 %s1466, 4
          %s1471 = int_to_ptr.hbm [resolvable:$true] %s1470
          %1473 = dma.vmem_to_hbm [thread:$0]  %s1469, 128, %s1471, %s1456
        $region80: #{tpu_custom_call.1} parent=75 // pred_fallthru
          _
      $region76: #{tpu_custom_call.1} parent=5 // pred_fallthru
        _
      %p1474 = scmp.le.s32.totalorder 2, %s23
      // Predicated region
      $region81: #{tpu_custom_call.1} parent=5 // pred_check
        %p1475 = pneg %p1474
      $region82: #{tpu_custom_call.1} parent=5 // pred_check_branch
        %1477 = sbr.rel (%p1475) target = $region84
      $region83: #{tpu_custom_call.1} parent=5 // pred_region
        %s1478 = ssub.s32 %s23, 2
        // Predicated region
        $region85: #{tpu_custom_call.1} parent=83 // pred_check
          %p1479 = pneg %p356
        $region86: #{tpu_custom_call.1} parent=83 // pred_check_branch
          %1481 = sbr.rel (%p1479) target = $region88
        $region87: #{tpu_custom_call.1} parent=83 // pred_region
          %s1482 = sand.u32 %s341, 1
          %s1483 = scalar_lea.sflag [#allocation3], %s1482
          %s1484 = sand.u32 %s341, 1
          %s1485 = smul.addr %s1484, 8
          %s1486 = scalar_lea.vmem [#allocation2], %s1485
          %1488 = dma.done %s1483, 128
        $region88: #{tpu_custom_call.1} parent=83 // pred_fallthru
          _
      $region84: #{tpu_custom_call.1} parent=5 // pred_fallthru
        _
    $region6: #{tpu_custom_call.1} parent=1 // loop_footer
      %s27 = sadd.s32 1, %s23
    $region7: #{tpu_custom_call.1} parent=1 // loop_footer_branch
      %22 = sbr.rel target = $region3
    $region8: #{tpu_custom_call.1} parent=1 // loop_exit
      _
    %1489 = vsyncpa [#allocation3], 1
    %s1490 = scalar_lea.sflag [#allocation3], 1
    %1491 = vsyncpa %s1490, 1

</llo_original>
